<compile_context>
chip_gen: v7x
topology: tpu7x:2x2x1
jax: 0.10.0
libtpu: 0.0.40
codegen_flags: <defaults>
</compile_context>

<pallas_src>
import functools

import numpy as np
import jax
import jax.numpy as jnp
from jax.experimental import pallas as pl
from jax.experimental.pallas import tpu as pltpu


# ---------------------------------------------------------------------------
# Static network config (matches the PyTorch constructor choices above)
# ---------------------------------------------------------------------------
C_IN, H_IN, W_IN = 4, 16, 16            # D_shape_in
C0, C1 = 8, 16                          # cnn_hiddens
K, S = 5, 2                             # kernel_sizes / strides
HO0 = (H_IN - K) // S + 1               # conv0 output spatial = 6
HO1 = (HO0 - K) // S + 1                # conv1 output spatial = 1 -> feat_size = C1
HID = 32                                # linear_hiddens[0] == policy_hiddens[0]
N_ACT = 6                               # D_out[0]

N_K0 = C_IN * H_IN * W_IN               # 1024: conv0 contraction dim (lane aligned)
NPOS = K * K                            # 25: conv0 output positions conv1 reads
Y0_LANES = 256                          # NPOS*C0 = 200 -> padded to 2 lane tiles
P_LANES = 128                           # lane width of every downstream layer
OUT_LANES = 128                         # lane-dense output slab width
NEG_BIG = -1e30                         # "minus inf" bias for padded logit lanes


# ---------------------------------------------------------------------------
# Fused Pallas kernel: conv0 -> conv1 -> linear0 -> policy0 -> softmax -> critic
# ---------------------------------------------------------------------------
def _fused_forward_kernel(p1_offs, x_ref, p0_ref, p1_ref, out_ref):
    (o_w1, o_b1, o_wl, o_bl, o_wp, o_bp, o_wo, o_bo, o_ph, o_pp, o_pb) = p1_offs

    def dot(a, b):
        # Conscious precision choice: DEFAULT (single bf16 MXU pass) -- same
        # operand-rounding class as the pure-JAX reference's default matmuls, so
        # both sides agree to f32-accumulation level.  Flip to
        # jax.lax.Precision.HIGHEST for trained / large-magnitude weights.
        return jnp.dot(a, b, preferred_element_type=jnp.float32,
                       precision=jax.lax.Precision.DEFAULT)

    x = x_ref[...]                                              # (B, 1024) f32

    # --- conv0 + ReLU: im2col + stride-2 selection folded into a dense
    #     zero-padded weight -> ONE matmul.  Output lanes = (pos, channel),
    #     only the 25 positions conv1 consumes; lanes >= 200 stay exactly 0.
    y0 = jnp.maximum(dot(x, p0_ref[0:N_K0, :]) + p0_ref[N_K0:N_K0 + 1, :], 0.0)

    # --- conv1 + ReLU: 5x5x8 window collapsed into ONE (256,128) matmul.
    #     1x1 spatial output => NCHW flatten == channel lane order already.
    feat = jnp.maximum(dot(y0, p1_ref[o_w1:o_w1 + Y0_LANES, :])
                       + p1_ref[o_b1:o_b1 + 1, :], 0.0)         # (B,128), true 16

    # --- linear0 + ReLU  (this is `raw_feat` for the critic)
    h = jnp.maximum(dot(feat, p1_ref[o_wl:o_wl + P_LANES, :])
                    + p1_ref[o_bl:o_bl + 1, :], 0.0)            # (B,128), true 32
    # --- policy0 + ReLU
    pf = jnp.maximum(dot(h, p1_ref[o_wp:o_wp + P_LANES, :])
                     + p1_ref[o_bp:o_bp + 1, :], 0.0)           # (B,128), true 32
    # --- output logits; padded lanes carry a -1e30 bias so they vanish in softmax
    logits = dot(pf, p1_ref[o_wo:o_wo + P_LANES, :]) + p1_ref[o_bo:o_bo + 1, :]

    # --- softmax (gumbel_noise=None path); exact division per correctness review
    m = jnp.max(logits, axis=-1, keepdims=True)
    e = jnp.exp(logits - m)
    prob = e / jnp.sum(e, axis=-1, keepdims=True)               # padded lanes == 0

    # --- critic (cat([raw_feat, prob]) @ Wc + bc) fused with lane-dense packing:
    #     out[:, 0] = value, out[:, 1:1+N_ACT] = prob, remaining lanes = 0.
    out_ref[...] = (dot(h, p1_ref[o_ph:o_ph + P_LANES, :])
                    + dot(prob, p1_ref[o_pp:o_pp + P_LANES, :])
                    + p1_ref[o_pb:o_pb + 1, :])


# ---------------------------------------------------------------------------
# pallas_call wrapper
# ---------------------------------------------------------------------------
def joint_cnn_policy_critic_forward(prep, x_nchw):
    B = x_nchw.shape[0]
    # The ONLY wrapper-side op: a free (bitcast) reshape of the contiguous NCHW
    # input.  No patches tensor is ever materialized in HBM.
    x_flat = x_nchw.reshape(B, N_K0)

    kernel = functools.partial(_fused_forward_kernel, prep['p1_offs'])
    vmem = lambda: pl.BlockSpec(memory_space=pltpu.MemorySpace.VMEM)
    out = pl.pallas_call(
        kernel,
        out_shape=jax.ShapeDtypeStruct((B, OUT_LANES), jnp.float32),
        in_specs=[vmem(), vmem(), vmem()],
        out_specs=vmem(),
    )(x_flat, prep['p0'], prep['p1'])

    val = out[:, 0]                     # (B,)
    prob = out[:, 1:1 + N_ACT]          # (B, N_ACT)
    return val, prob


# ---------------------------------------------------------------------------
# One-time parameter packing (host/prep side)
# ---------------------------------------------------------------------------
def _pack_rows(blocks, width):
    """Stack same-width 2-D blocks; every section start is 8-row aligned."""
    pieces, offs, r = [], [], 0
    for b in blocks:
        assert b.shape[1] == width
        offs.append(r)
        pieces.append(b.astype(np.float32))
        pad = (-b.shape[0]) % 8
        if pad:
            pieces.append(np.zeros((pad, width), np.float32))
        r += b.shape[0] + pad
    return np.concatenate(pieces, axis=0), tuple(offs)


def prepare_params(params):
    # Guards for the assumptions baked into the kernel layout (correctness note 3).
    assert HO0 == 6 and HO1 == 1, "conv1 must have 1x1 output (flatten == channel lanes)"
    assert K <= HO0, "conv1 window must fit inside the conv0 map"
    assert NPOS * C0 <= Y0_LANES and N_K0 % 128 == 0 and Y0_LANES % 128 == 0
    assert C1 <= P_LANES and HID <= P_LANES and N_ACT + 1 <= OUT_LANES

    w0 = np.asarray(params['conv0_w'], np.float32)      # (C0, C_IN, K, K) OIHW
    b0 = np.asarray(params['conv0_b'], np.float32)
    w1 = np.asarray(params['conv1_w'], np.float32)      # (C1, C0, K, K)
    b1 = np.asarray(params['conv1_b'], np.float32)

    # ---- p0: conv0 folded into a dense (1024, 256) weight + bias row ---------
    # y0[b, (oh*K+ow)*C0 + o] = b0[o] + sum_{c,kh,kw} W0[o,c,kh,kw] * x[b,c,S*oh+kh,S*ow+kw]
    W0b = np.zeros((N_K0, Y0_LANES), np.float32)
    b0b = np.zeros((1, Y0_LANES), np.float32)
    for oh in range(K):                 # only the K x K positions conv1 reads
        for ow in range(K):
            p = oh * K + ow
            b0b[0, p * C0:(p + 1) * C0] = b0
            for kh in range(K):
                for kw in range(K):
                    h_in = S * oh + kh
                    w_in = S * ow + kw
                    rows = np.arange(C_IN) * (H_IN * W_IN) + h_in * W_IN + w_in
                    W0b[rows, p * C0:(p + 1) * C0] = w0[:, :, kh, kw].T   # (C_IN, C0)
    p0, p0_offs = _pack_rows([W0b, b0b], Y0_LANES)
    assert p0_offs == (0, N_K0)

    # ---- p1: everything else, 128 lanes wide, 8-row aligned sections ---------
    # conv1 collapsed: feat[b, o1] = b1[o1] + sum_{kh,kw,o} W1[o1,o,kh,kw] * y0[b,(kh*K+kw)*C0+o]
    W1b = np.zeros((Y0_LANES, P_LANES), np.float32)
    for kh in range(K):
        for kw in range(K):
            p = kh * K + kw
            W1b[p * C0:(p + 1) * C0, :C1] = w1[:, :, kh, kw].T            # (C0, C1)
    b1b = np.zeros((1, P_LANES), np.float32)
    b1b[0, :C1] = b1

    def pad_mat(x, rows, cols, fill=0.0):
        out = np.full((rows, cols), fill, np.float32)
        out[:x.shape[0], :x.shape[1]] = np.asarray(x, np.float32)
        return out

    Wl = pad_mat(params['lin0_w'], P_LANES, P_LANES)                      # (16,32)
    bl = pad_mat(np.asarray(params['lin0_b']).reshape(1, HID), 1, P_LANES)
    Wp = pad_mat(params['pol0_w'], P_LANES, P_LANES)                      # (32,32)
    bp = pad_mat(np.asarray(params['pol0_b']).reshape(1, HID), 1, P_LANES)
    Wo = pad_mat(params['out0_w'], P_LANES, P_LANES)                      # (32,6)
    bo = pad_mat(np.asarray(params['out0_b']).reshape(1, N_ACT), 1, P_LANES,
                 fill=NEG_BIG)

    # Critic folded into a single lane-dense projection to (B, 128):
    #   col 0         = value = h @ wc[:HID] + prob @ wc[HID:] + bc
    #   cols 1..N_ACT = prob  (identity pass-through)
    wc = np.asarray(params['cri0_w'], np.float32)                         # (HID+N_ACT, 1)
    bc = np.asarray(params['cri0_b'], np.float32)                         # (1,)
    ProjH = np.zeros((P_LANES, OUT_LANES), np.float32)
    ProjH[:HID, 0] = wc[:HID, 0]
    ProjP = np.zeros((P_LANES, OUT_LANES), np.float32)
    ProjP[:N_ACT, 0] = wc[HID:, 0]
    ProjP[np.arange(N_ACT), 1 + np.arange(N_ACT)] = 1.0
    pbias = np.zeros((1, OUT_LANES), np.float32)
    pbias[0, 0] = bc[0]

    p1, p1_offs = _pack_rows(
        [W1b, b1b, Wl, bl, Wp, bp, Wo, bo, ProjH, ProjP, pbias], P_LANES)

    return {'p0': jnp.asarray(p0), 'p1': jnp.asarray(p1), 'p1_offs': p1_offs}


# ---------------------------------------------------------------------------
# Deterministic parameter init (synthetic; shapes from the module's __init__)
# ---------------------------------------------------------------------------
def init_params(key):
    ks = jax.random.split(key, 12)
    n = lambda k, s: 0.1 * jax.random.normal(k, s, jnp.float32)
    return {
        'conv0_w': n(ks[0], (C0, C_IN, K, K)),   # Conv2d(4 -> 8, k=5, s=2), OIHW
        'conv0_b': n(ks[1], (C0,)),
        'conv1_w': n(ks[2], (C1, C0, K, K)),     # Conv2d(8 -> 16, k=5, s=2)
        'conv1_b': n(ks[3], (C1,)),
        'lin0_w':  n(ks[4], (C1, HID)),          # Linear(feat_size=16 -> 32), (in,out)
        'lin0_b':  n(ks[5], (HID,)),
        'pol0_w':  n(ks[6], (HID, HID)),         # policy_layer0
        'pol0_b':  n(ks[7], (HID,)),
        'out0_w':  n(ks[8], (HID, N_ACT)),       # output_layer0 (D_out = [6])
        'out0_b':  n(ks[9], (N_ACT,)),
        'cri0_w':  n(ks[10], (HID + N_ACT, 1)),  # critic_layer0 (32 + 6 -> 1)
        'cri0_b':  n(ks[11], (1,)),
    }


# Pure-JAX reference to validate kernel semantics.
def reference_forward(params, x_nchw):
    def conv(x, w, b, s):
        y = jax.lax.conv_general_dilated(x, w, (s, s), 'VALID',
                                         dimension_numbers=('NCHW', 'OIHW', 'NCHW'))
        return jax.nn.relu(y + b[None, :, None, None])
    x = conv(x_nchw, params['conv0_w'], params['conv0_b'], S)
    x = conv(x, params['conv1_w'], params['conv1_b'], S)
    feat = x.reshape(x.shape[0], -1)
    h = jax.nn.relu(feat @ params['lin0_w'] + params['lin0_b'])
    p = jax.nn.relu(h @ params['pol0_w'] + params['pol0_b'])
    logits = p @ params['out0_w'] + params['out0_b']
    prob = jax.nn.softmax(logits, axis=-1)
    val = jnp.concatenate([h, prob], axis=-1) @ params['cri0_w'] + params['cri0_b']
    return jnp.squeeze(val), prob


if __name__ == "__main__":
    key = jax.random.PRNGKey(0)
    pkey, xkey = jax.random.split(key)
    params = init_params(pkey)
    x = jax.random.normal(xkey, (2, C_IN, H_IN, W_IN), jnp.float32)  # NCHW, batch=2

    prep = prepare_params(params)      # one-time packing into two lane-dense buffers
    fwd = jax.jit(functools.partial(joint_cnn_policy_critic_forward, prep))
    val, prob = fwd(x)
    jax.block_until_ready((val, prob))

    val_ref, prob_ref = reference_forward(params, x)
    assert val.shape == (2,) and prob.shape == (2, N_ACT)
    # Kernel and reference both use DEFAULT (bf16-pass MXU) operand rounding, so
    # they agree to f32-accumulation level; 2e-3 leaves ample margin.
    assert jnp.allclose(prob, prob_ref, atol=2e-3, rtol=2e-3)
    assert jnp.allclose(val, val_ref, atol=2e-3, rtol=2e-3)
    # Exact softmax divide (no approx reciprocal): rows sum to 1.
    assert jnp.allclose(jnp.sum(prob, axis=-1), 1.0, atol=1e-5)

    print("KERNEL_OK")
</pallas_src>

<mosaic_0001>
module attributes {stable_mosaic.version = 11 : i64} {
  func.func @_fused_forward_kernel(%arg0: memref<2x1024xf32, #tpu.memory_space<vmem>>, %arg1: memref<1032x256xf32, #tpu.memory_space<vmem>>, %arg2: memref<936x128xf32, #tpu.memory_space<vmem>>, %arg3: memref<2x128xf32, #tpu.memory_space<vmem>>) attributes {dimension_semantics = [], scalar_prefetch = 0 : i64, scratch_operands = 0 : i64, tpu.core_type = #tpu.core_type<tc>} {
    %c0 = arith.constant 0 : index
    %c0_0 = arith.constant 0 : index
    %0 = vector.load %arg0[%c0, %c0_0] : memref<2x1024xf32, #tpu.memory_space<vmem>>, vector<2x1024xf32>
    %c0_1 = arith.constant 0 : index
    %c0_2 = arith.constant 0 : index
    %1 = vector.load %arg1[%c0_1, %c0_2] : memref<1032x256xf32, #tpu.memory_space<vmem>>, vector<1024x256xf32>
    %cst = arith.constant dense<0.000000e+00> : vector<2x256xf32>
    %2 = tpu.matmul %0, %1, %cst {dimension_numbers = #tpu.dot_dimension_numbers<[1], [0], [0], [1], [0, 0, 1, 1], [], []>} : vector<2x1024xf32>, vector<1024x256xf32>, vector<2x256xf32> -> vector<2x256xf32>
    %c1024 = arith.constant 1024 : index
    %c0_3 = arith.constant 0 : index
    %3 = vector.load %arg1[%c1024, %c0_3] : memref<1032x256xf32, #tpu.memory_space<vmem>>, vector<1x256xf32>
    %4 = vector.broadcast %3 : vector<1x256xf32> to vector<2x256xf32>
    %5 = arith.addf %2, %4 : vector<2x256xf32>
    %cst_4 = arith.constant 0.000000e+00 : f32
    %6 = vector.broadcast %cst_4 : f32 to vector<2x256xf32>
    %7 = arith.maximumf %5, %6 : vector<2x256xf32>
    %c0_5 = arith.constant 0 : index
    %c0_6 = arith.constant 0 : index
    %8 = vector.load %arg2[%c0_5, %c0_6] : memref<936x128xf32, #tpu.memory_space<vmem>>, vector<256x128xf32>
    %cst_7 = arith.constant dense<0.000000e+00> : vector<2x128xf32>
    %9 = tpu.matmul %7, %8, %cst_7 {dimension_numbers = #tpu.dot_dimension_numbers<[1], [0], [0], [1], [0, 0, 1, 1], [], []>} : vector<2x256xf32>, vector<256x128xf32>, vector<2x128xf32> -> vector<2x128xf32>
    %c256 = arith.constant 256 : index
    %c0_8 = arith.constant 0 : index
    %10 = vector.load %arg2[%c256, %c0_8] : memref<936x128xf32, #tpu.memory_space<vmem>>, vector<1x128xf32>
    %11 = vector.broadcast %10 : vector<1x128xf32> to vector<2x128xf32>
    %12 = arith.addf %9, %11 : vector<2x128xf32>
    %cst_9 = arith.constant 0.000000e+00 : f32
    %13 = vector.broadcast %cst_9 : f32 to vector<2x128xf32>
    %14 = arith.maximumf %12, %13 : vector<2x128xf32>
    %c264 = arith.constant 264 : index
    %c0_10 = arith.constant 0 : index
    %15 = vector.load %arg2[%c264, %c0_10] : memref<936x128xf32, #tpu.memory_space<vmem>>, vector<128x128xf32>
    %cst_11 = arith.constant dense<0.000000e+00> : vector<2x128xf32>
    %16 = tpu.matmul %14, %15, %cst_11 {dimension_numbers = #tpu.dot_dimension_numbers<[1], [0], [0], [1], [0, 0, 1, 1], [], []>} : vector<2x128xf32>, vector<128x128xf32>, vector<2x128xf32> -> vector<2x128xf32>
    %c392 = arith.constant 392 : index
    %c0_12 = arith.constant 0 : index
    %17 = vector.load %arg2[%c392, %c0_12] : memref<936x128xf32, #tpu.memory_space<vmem>>, vector<1x128xf32>
    %18 = vector.broadcast %17 : vector<1x128xf32> to vector<2x128xf32>
    %19 = arith.addf %16, %18 : vector<2x128xf32>
    %cst_13 = arith.constant 0.000000e+00 : f32
    %20 = vector.broadcast %cst_13 : f32 to vector<2x128xf32>
    %21 = arith.maximumf %19, %20 : vector<2x128xf32>
    %c400 = arith.constant 400 : index
    %c0_14 = arith.constant 0 : index
    %22 = vector.load %arg2[%c400, %c0_14] : memref<936x128xf32, #tpu.memory_space<vmem>>, vector<128x128xf32>
    %cst_15 = arith.constant dense<0.000000e+00> : vector<2x128xf32>
    %23 = tpu.matmul %21, %22, %cst_15 {dimension_numbers = #tpu.dot_dimension_numbers<[1], [0], [0], [1], [0, 0, 1, 1], [], []>} : vector<2x128xf32>, vector<128x128xf32>, vector<2x128xf32> -> vector<2x128xf32>
    %c528 = arith.constant 528 : index
    %c0_16 = arith.constant 0 : index
    %24 = vector.load %arg2[%c528, %c0_16] : memref<936x128xf32, #tpu.memory_space<vmem>>, vector<1x128xf32>
    %25 = vector.broadcast %24 : vector<1x128xf32> to vector<2x128xf32>
    %26 = arith.addf %23, %25 : vector<2x128xf32>
    %cst_17 = arith.constant 0.000000e+00 : f32
    %27 = vector.broadcast %cst_17 : f32 to vector<2x128xf32>
    %28 = arith.maximumf %26, %27 : vector<2x128xf32>
    %c536 = arith.constant 536 : index
    %c0_18 = arith.constant 0 : index
    %29 = vector.load %arg2[%c536, %c0_18] : memref<936x128xf32, #tpu.memory_space<vmem>>, vector<128x128xf32>
    %cst_19 = arith.constant dense<0.000000e+00> : vector<2x128xf32>
    %30 = tpu.matmul %28, %29, %cst_19 {dimension_numbers = #tpu.dot_dimension_numbers<[1], [0], [0], [1], [0, 0, 1, 1], [], []>} : vector<2x128xf32>, vector<128x128xf32>, vector<2x128xf32> -> vector<2x128xf32>
    %c664 = arith.constant 664 : index
    %c0_20 = arith.constant 0 : index
    %31 = vector.load %arg2[%c664, %c0_20] : memref<936x128xf32, #tpu.memory_space<vmem>>, vector<1x128xf32>
    %32 = vector.broadcast %31 : vector<1x128xf32> to vector<2x128xf32>
    %33 = arith.addf %30, %32 : vector<2x128xf32>
    %cst_21 = arith.constant dense<0xFF800000> : vector<2xf32>
    %34 = vector.multi_reduction <maximumf>, %33, %cst_21 [1] : vector<2x128xf32> to vector<2xf32>
    %35 = vector.shape_cast %34 : vector<2xf32> to vector<2x1xf32>
    %36 = vector.broadcast %35 : vector<2x1xf32> to vector<2x128xf32>
    %37 = arith.subf %33, %36 : vector<2x128xf32>
    %38 = math.exp %37 : vector<2x128xf32>
    %cst_22 = arith.constant dense<0.000000e+00> : vector<2xf32>
    %39 = vector.multi_reduction <add>, %38, %cst_22 [1] : vector<2x128xf32> to vector<2xf32>
    %40 = vector.shape_cast %39 : vector<2xf32> to vector<2x1xf32>
    %41 = vector.broadcast %40 : vector<2x1xf32> to vector<2x128xf32>
    %42 = arith.divf %38, %41 : vector<2x128xf32>
    %c672 = arith.constant 672 : index
    %c0_23 = arith.constant 0 : index
    %43 = vector.load %arg2[%c672, %c0_23] : memref<936x128xf32, #tpu.memory_space<vmem>>, vector<128x128xf32>
    %cst_24 = arith.constant dense<0.000000e+00> : vector<2x128xf32>
    %44 = tpu.matmul %21, %43, %cst_24 {dimension_numbers = #tpu.dot_dimension_numbers<[1], [0], [0], [1], [0, 0, 1, 1], [], []>} : vector<2x128xf32>, vector<128x128xf32>, vector<2x128xf32> -> vector<2x128xf32>
    %c800 = arith.constant 800 : index
    %c0_25 = arith.constant 0 : index
    %45 = vector.load %arg2[%c800, %c0_25] : memref<936x128xf32, #tpu.memory_space<vmem>>, vector<128x128xf32>
    %cst_26 = arith.constant dense<0.000000e+00> : vector<2x128xf32>
    %46 = tpu.matmul %42, %45, %cst_26 {dimension_numbers = #tpu.dot_dimension_numbers<[1], [0], [0], [1], [0, 0, 1, 1], [], []>} : vector<2x128xf32>, vector<128x128xf32>, vector<2x128xf32> -> vector<2x128xf32>
    %47 = arith.addf %44, %46 : vector<2x128xf32>
    %c928 = arith.constant 928 : index
    %c0_27 = arith.constant 0 : index
    %48 = vector.load %arg2[%c928, %c0_27] : memref<936x128xf32, #tpu.memory_space<vmem>>, vector<1x128xf32>
    %49 = vector.broadcast %48 : vector<1x128xf32> to vector<2x128xf32>
    %50 = arith.addf %47, %49 : vector<2x128xf32>
    %c0_28 = arith.constant 0 : index
    %c0_29 = arith.constant 0 : index
    %51 = vector.load %arg3[%c0_28, %c0_29] : memref<2x128xf32, #tpu.memory_space<vmem>>, vector<2x128xf32>
    tpu.vector_store %arg3[%c0_28, %c0_29], %50 {strides = array<i32>} : memref<2x128xf32, #tpu.memory_space<vmem>>, vector<2x128xf32>,
    return
  }
}

</mosaic_0001>

<llo_original>
// kernel: joint_cnn_policy_critic_forward.1
$region0: #{joint_cnn_policy_critic_forward.1}
  #allocation0 [shape = 'u32[]', space=smem, size = 0x4, offset = 0x4, fixed_abs, tag = 'smem constant byte address 0x4 - core index']
  #allocation1 [shape = 'u32[144,128]{1,0:T(1,128)}', space=vmem, size = 0x12000, scoped, tag = 'internal scratch']
  %s0 = inlined_call_operand.vmem [shape: f32[2,1024], index: 0, kind: input, shape index: {}]
  %s1 = inlined_call_operand.hbm [shape: f32[1032,256], index: 1, kind: input, shape index: {}]
  %s2 = inlined_call_operand.hbm [shape: f32[936,128], index: 2, kind: input, shape index: {}]
  %s3 = inlined_call_operand.vmem [shape: f32[2,128], index: 3, kind: output, shape index: {}]
  %s4 = sld [smem:[#allocation0]]
  $region30: #{joint_cnn_policy_critic_forward.1} parent=0
    _
  %s6 = ssub.s32 1, %s4
  %s7 = scalar_select 0, %s6, %s4
  $region1: #{joint_cnn_policy_critic_forward.1} parent=0
    #allocation2 [shape = 'u8[1056768]{0}', space=vmem, size = 0x102000, scoped, tag = 'input window, operand 1, single buffered']
    #allocation3 [shape = 's32[1]{0}', space=sflag, size = 0x4, scoped, tag = 'scoped memory for joint_cnn_policy_critic_forward.1']
    #allocation4 [shape = 'u8[479232]{0}', space=vmem, size = 0x75000, scoped, tag = 'input window, operand 2, single buffered']
    #allocation5 [shape = 's32[1]{0}', space=sflag, size = 0x4, scoped, tag = 'scoped memory for joint_cnn_policy_critic_forward.1']
    %8 = vsyncpa [#allocation3], 0
    %9 = vsyncpa [#allocation5], 0
    // Predicated region
    $region2: #{joint_cnn_policy_critic_forward.1} parent=1 // pred_check
      _
    $region3: #{joint_cnn_policy_critic_forward.1} parent=1 // pred_check_branch
      %11 = sbr.rel (0) target = $region5
    $region4: #{joint_cnn_policy_critic_forward.1} parent=1 // pred_region
      _
    $region5: #{joint_cnn_policy_critic_forward.1} parent=1 // pred_fallthru
      _
    // Predicated region
    $region6: #{joint_cnn_policy_critic_forward.1} parent=1 // pred_check
      _
    $region7: #{joint_cnn_policy_critic_forward.1} parent=1 // pred_check_branch
      %13 = sbr.rel (0) target = $region9
    $region8: #{joint_cnn_policy_critic_forward.1} parent=1 // pred_region
      %s15 = ssub.s32 33024, 33024
      %16 = vsyncadd [#allocation3], %s15
      %s17 = sshll.u32 [#allocation2], 4
      %s18 = int_to_ptr.vmem [resolvable:$true] %s17
      %23 = dma.hbm_to_vmem [thread:$0]  %s1, 33024, %s18, [#allocation3], 256, 256, 16
    $region9: #{joint_cnn_policy_critic_forward.1} parent=1 // pred_fallthru
      _
    // Predicated region
    $region10: #{joint_cnn_policy_critic_forward.1} parent=1 // pred_check
      _
    $region11: #{joint_cnn_policy_critic_forward.1} parent=1 // pred_check_branch
      %25 = sbr.rel (0) target = $region13
    $region12: #{joint_cnn_policy_critic_forward.1} parent=1 // pred_region
      %s27 = ssub.s32 14976, 14976
      %28 = vsyncadd [#allocation5], %s27
      %s29 = sshll.u32 [#allocation4], 4
      %s30 = int_to_ptr.vmem [resolvable:$true] %s29
      %35 = dma.hbm_to_vmem [thread:$0]  %s2, 14976, %s30, [#allocation5], 128, 128, 8
    $region13: #{joint_cnn_policy_critic_forward.1} parent=1 // pred_fallthru
      _
    // Predicated region
    $region14: #{joint_cnn_policy_critic_forward.1} parent=1 // pred_check
      _
    $region15: #{joint_cnn_policy_critic_forward.1} parent=1 // pred_check_branch
      %37 = sbr.rel (0) target = $region17
    $region16: #{joint_cnn_policy_critic_forward.1} parent=1 // pred_region
      %38 = dma.done [#allocation3], 33024
    $region17: #{joint_cnn_policy_critic_forward.1} parent=1 // pred_fallthru
      _
    // Predicated region
    $region18: #{joint_cnn_policy_critic_forward.1} parent=1 // pred_check
      _
    $region19: #{joint_cnn_policy_critic_forward.1} parent=1 // pred_check_branch
      %40 = sbr.rel (0) target = $region21
    $region20: #{joint_cnn_policy_critic_forward.1} parent=1 // pred_region
      %41 = dma.done [#allocation5], 14976
    $region21: #{joint_cnn_policy_critic_forward.1} parent=1 // pred_fallthru
      _
    %v42 = vld [vmem:[%s0] sm:$0xff]
    %v43 = vld [vmem:[%s0 + $0x8] sm:$0xff]
    %v44 = vld [vmem:[#allocation2] sm:$0xff]
    %v45 = vld [vmem:[#allocation2 + $0x8] sm:$0xff]
    %v46 = vld [vmem:[#allocation2 + $0x10] sm:$0xff]
    %v47 = vld [vmem:[#allocation2 + $0x18] sm:$0xff]
    %v48 = vld [vmem:[#allocation2 + $0x20] sm:$0xff]
    %v49 = vld [vmem:[#allocation2 + $0x28] sm:$0xff]
    %v50 = vld [vmem:[#allocation2 + $0x30] sm:$0xff]
    %v51 = vld [vmem:[#allocation2 + $0x38] sm:$0xff]
    %v52 = vld [vmem:[#allocation2 + $0x40] sm:$0xff]
    %v53 = vld [vmem:[#allocation2 + $0x48] sm:$0xff]
    %v54 = vld [vmem:[#allocation2 + $0x50] sm:$0xff]
    %v55 = vld [vmem:[#allocation2 + $0x58] sm:$0xff]
    %v56 = vld [vmem:[#allocation2 + $0x60] sm:$0xff]
    %v57 = vld [vmem:[#allocation2 + $0x68] sm:$0xff]
    %v58 = vld [vmem:[#allocation2 + $0x70] sm:$0xff]
    %v59 = vld [vmem:[#allocation2 + $0x78] sm:$0xff]
    %v60 = vld [vmem:[#allocation2 + $0x80] sm:$0xff]
    %v61 = vld [vmem:[#allocation2 + $0x88] sm:$0xff]
    %v62 = vld [vmem:[#allocation2 + $0x90] sm:$0xff]
    %v63 = vld [vmem:[#allocation2 + $0x98] sm:$0xff]
    %v64 = vld [vmem:[#allocation2 + $0xa0] sm:$0xff]
    %v65 = vld [vmem:[#allocation2 + $0xa8] sm:$0xff]
    %v66 = vld [vmem:[#allocation2 + $0xb0] sm:$0xff]
    %v67 = vld [vmem:[#allocation2 + $0xb8] sm:$0xff]
    %v68 = vld [vmem:[#allocation2 + $0xc0] sm:$0xff]
    %v69 = vld [vmem:[#allocation2 + $0xc8] sm:$0xff]
    %v70 = vld [vmem:[#allocation2 + $0xd0] sm:$0xff]
    %v71 = vld [vmem:[#allocation2 + $0xd8] sm:$0xff]
    %v72 = vld [vmem:[#allocation2 + $0xe0] sm:$0xff]
    %v73 = vld [vmem:[#allocation2 + $0xe8] sm:$0xff]
    %v74 = vld [vmem:[#allocation2 + $0xf0] sm:$0xff]
    %v75 = vld [vmem:[#allocation2 + $0xf8] sm:$0xff]
    %v76 = vld [vmem:[#allocation2 + $0x100] sm:$0xff]
    %v77 = vld [vmem:[#allocation2 + $0x108] sm:$0xff]
    %v78 = vld [vmem:[#allocation2 + $0x110] sm:$0xff]
    %v79 = vld [vmem:[#allocation2 + $0x118] sm:$0xff]
    %v80 = vld [vmem:[#allocation2 + $0x120] sm:$0xff]
    %v81 = vld [vmem:[#allocation2 + $0x128] sm:$0xff]
    %v82 = vld [vmem:[#allocation2 + $0x130] sm:$0xff]
    %v83 = vld [vmem:[#allocation2 + $0x138] sm:$0xff]
    %v84 = vld [vmem:[#allocation2 + $0x140] sm:$0xff]
    %v85 = vld [vmem:[#allocation2 + $0x148] sm:$0xff]
    %v86 = vld [vmem:[#allocation2 + $0x150] sm:$0xff]
    %v87 = vld [vmem:[#allocation2 + $0x158] sm:$0xff]
    %v88 = vld [vmem:[#allocation2 + $0x160] sm:$0xff]
    %v89 = vld [vmem:[#allocation2 + $0x168] sm:$0xff]
    %v90 = vld [vmem:[#allocation2 + $0x170] sm:$0xff]
    %v91 = vld [vmem:[#allocation2 + $0x178] sm:$0xff]
    %v92 = vld [vmem:[#allocation2 + $0x180] sm:$0xff]
    %v93 = vld [vmem:[#allocation2 + $0x188] sm:$0xff]
    %v94 = vld [vmem:[#allocation2 + $0x190] sm:$0xff]
    %v95 = vld [vmem:[#allocation2 + $0x198] sm:$0xff]
    %v96 = vld [vmem:[#allocation2 + $0x1a0] sm:$0xff]
    %v97 = vld [vmem:[#allocation2 + $0x1a8] sm:$0xff]
    %v98 = vld [vmem:[#allocation2 + $0x1b0] sm:$0xff]
    %v99 = vld [vmem:[#allocation2 + $0x1b8] sm:$0xff]
    %v100 = vld [vmem:[#allocation2 + $0x1c0] sm:$0xff]
    %v101 = vld [vmem:[#allocation2 + $0x1c8] sm:$0xff]
    %v102 = vld [vmem:[#allocation2 + $0x1d0] sm:$0xff]
    %v103 = vld [vmem:[#allocation2 + $0x1d8] sm:$0xff]
    %v104 = vld [vmem:[#allocation2 + $0x1e0] sm:$0xff]
    %v105 = vld [vmem:[#allocation2 + $0x1e8] sm:$0xff]
    %v106 = vld [vmem:[#allocation2 + $0x1f0] sm:$0xff]
    %v107 = vld [vmem:[#allocation2 + $0x1f8] sm:$0xff]
    %v108 = vld [vmem:[#allocation2 + $0x200] sm:$0xff]
    %v109 = vld [vmem:[#allocation2 + $0x208] sm:$0xff]
    %v110 = vld [vmem:[#allocation2 + $0x210] sm:$0xff]
    %v111 = vld [vmem:[#allocation2 + $0x218] sm:$0xff]
    %v112 = vld [vmem:[#allocation2 + $0x220] sm:$0xff]
    %v113 = vld [vmem:[#allocation2 + $0x228] sm:$0xff]
    %v114 = vld [vmem:[#allocation2 + $0x230] sm:$0xff]
    %v115 = vld [vmem:[#allocation2 + $0x238] sm:$0xff]
    %v116 = vld [vmem:[#allocation2 + $0x240] sm:$0xff]
    %v117 = vld [vmem:[#allocation2 + $0x248] sm:$0xff]
    %v118 = vld [vmem:[#allocation2 + $0x250] sm:$0xff]
    %v119 = vld [vmem:[#allocation2 + $0x258] sm:$0xff]
    %v120 = vld [vmem:[#allocation2 + $0x260] sm:$0xff]
    %v121 = vld [vmem:[#allocation2 + $0x268] sm:$0xff]
    %v122 = vld [vmem:[#allocation2 + $0x270] sm:$0xff]
    %v123 = vld [vmem:[#allocation2 + $0x278] sm:$0xff]
    %v124 = vld [vmem:[#allocation2 + $0x280] sm:$0xff]
    %v125 = vld [vmem:[#allocation2 + $0x288] sm:$0xff]
    %v126 = vld [vmem:[#allocation2 + $0x290] sm:$0xff]
    %v127 = vld [vmem:[#allocation2 + $0x298] sm:$0xff]
    %v128 = vld [vmem:[#allocation2 + $0x2a0] sm:$0xff]
    %v129 = vld [vmem:[#allocation2 + $0x2a8] sm:$0xff]
    %v130 = vld [vmem:[#allocation2 + $0x2b0] sm:$0xff]
    %v131 = vld [vmem:[#allocation2 + $0x2b8] sm:$0xff]
    %v132 = vld [vmem:[#allocation2 + $0x2c0] sm:$0xff]
    %v133 = vld [vmem:[#allocation2 + $0x2c8] sm:$0xff]
    %v134 = vld [vmem:[#allocation2 + $0x2d0] sm:$0xff]
    %v135 = vld [vmem:[#allocation2 + $0x2d8] sm:$0xff]
    %v136 = vld [vmem:[#allocation2 + $0x2e0] sm:$0xff]
    %v137 = vld [vmem:[#allocation2 + $0x2e8] sm:$0xff]
    %v138 = vld [vmem:[#allocation2 + $0x2f0] sm:$0xff]
    %v139 = vld [vmem:[#allocation2 + $0x2f8] sm:$0xff]
    %v140 = vld [vmem:[#allocation2 + $0x300] sm:$0xff]
    %v141 = vld [vmem:[#allocation2 + $0x308] sm:$0xff]
    %v142 = vld [vmem:[#allocation2 + $0x310] sm:$0xff]
    %v143 = vld [vmem:[#allocation2 + $0x318] sm:$0xff]
    %v144 = vld [vmem:[#allocation2 + $0x320] sm:$0xff]
    %v145 = vld [vmem:[#allocation2 + $0x328] sm:$0xff]
    %v146 = vld [vmem:[#allocation2 + $0x330] sm:$0xff]
    %v147 = vld [vmem:[#allocation2 + $0x338] sm:$0xff]
    %v148 = vld [vmem:[#allocation2 + $0x340] sm:$0xff]
    %v149 = vld [vmem:[#allocation2 + $0x348] sm:$0xff]
    %v150 = vld [vmem:[#allocation2 + $0x350] sm:$0xff]
    %v151 = vld [vmem:[#allocation2 + $0x358] sm:$0xff]
    %v152 = vld [vmem:[#allocation2 + $0x360] sm:$0xff]
    %v153 = vld [vmem:[#allocation2 + $0x368] sm:$0xff]
    %v154 = vld [vmem:[#allocation2 + $0x370] sm:$0xff]
    %v155 = vld [vmem:[#allocation2 + $0x378] sm:$0xff]
    %v156 = vld [vmem:[#allocation2 + $0x380] sm:$0xff]
    %v157 = vld [vmem:[#allocation2 + $0x388] sm:$0xff]
    %v158 = vld [vmem:[#allocation2 + $0x390] sm:$0xff]
    %v159 = vld [vmem:[#allocation2 + $0x398] sm:$0xff]
    %v160 = vld [vmem:[#allocation2 + $0x3a0] sm:$0xff]
    %v161 = vld [vmem:[#allocation2 + $0x3a8] sm:$0xff]
    %v162 = vld [vmem:[#allocation2 + $0x3b0] sm:$0xff]
    %v163 = vld [vmem:[#allocation2 + $0x3b8] sm:$0xff]
    %v164 = vld [vmem:[#allocation2 + $0x3c0] sm:$0xff]
    %v165 = vld [vmem:[#allocation2 + $0x3c8] sm:$0xff]
    %v166 = vld [vmem:[#allocation2 + $0x3d0] sm:$0xff]
    %v167 = vld [vmem:[#allocation2 + $0x3d8] sm:$0xff]
    %v168 = vld [vmem:[#allocation2 + $0x3e0] sm:$0xff]
    %v169 = vld [vmem:[#allocation2 + $0x3e8] sm:$0xff]
    %v170 = vld [vmem:[#allocation2 + $0x3f0] sm:$0xff]
    %v171 = vld [vmem:[#allocation2 + $0x3f8] sm:$0xff]
    %v172 = vld [vmem:[#allocation2 + $0x400] sm:$0xff]
    %v173 = vld [vmem:[#allocation2 + $0x408] sm:$0xff]
    %v174 = vld [vmem:[#allocation2 + $0x410] sm:$0xff]
    %v175 = vld [vmem:[#allocation2 + $0x418] sm:$0xff]
    %v176 = vld [vmem:[#allocation2 + $0x420] sm:$0xff]
    %v177 = vld [vmem:[#allocation2 + $0x428] sm:$0xff]
    %v178 = vld [vmem:[#allocation2 + $0x430] sm:$0xff]
    %v179 = vld [vmem:[#allocation2 + $0x438] sm:$0xff]
    %v180 = vld [vmem:[#allocation2 + $0x440] sm:$0xff]
    %v181 = vld [vmem:[#allocation2 + $0x448] sm:$0xff]
    %v182 = vld [vmem:[#allocation2 + $0x450] sm:$0xff]
    %v183 = vld [vmem:[#allocation2 + $0x458] sm:$0xff]
    %v184 = vld [vmem:[#allocation2 + $0x460] sm:$0xff]
    %v185 = vld [vmem:[#allocation2 + $0x468] sm:$0xff]
    %v186 = vld [vmem:[#allocation2 + $0x470] sm:$0xff]
    %v187 = vld [vmem:[#allocation2 + $0x478] sm:$0xff]
    %v188 = vld [vmem:[#allocation2 + $0x480] sm:$0xff]
    %v189 = vld [vmem:[#allocation2 + $0x488] sm:$0xff]
    %v190 = vld [vmem:[#allocation2 + $0x490] sm:$0xff]
    %v191 = vld [vmem:[#allocation2 + $0x498] sm:$0xff]
    %v192 = vld [vmem:[#allocation2 + $0x4a0] sm:$0xff]
    %v193 = vld [vmem:[#allocation2 + $0x4a8] sm:$0xff]
    %v194 = vld [vmem:[#allocation2 + $0x4b0] sm:$0xff]
    %v195 = vld [vmem:[#allocation2 + $0x4b8] sm:$0xff]
    %v196 = vld [vmem:[#allocation2 + $0x4c0] sm:$0xff]
    %v197 = vld [vmem:[#allocation2 + $0x4c8] sm:$0xff]
    %v198 = vld [vmem:[#allocation2 + $0x4d0] sm:$0xff]
    %v199 = vld [vmem:[#allocation2 + $0x4d8] sm:$0xff]
    %v200 = vld [vmem:[#allocation2 + $0x4e0] sm:$0xff]
    %v201 = vld [vmem:[#allocation2 + $0x4e8] sm:$0xff]
    %v202 = vld [vmem:[#allocation2 + $0x4f0] sm:$0xff]
    %v203 = vld [vmem:[#allocation2 + $0x4f8] sm:$0xff]
    %v204 = vld [vmem:[#allocation2 + $0x500] sm:$0xff]
    %v205 = vld [vmem:[#allocation2 + $0x508] sm:$0xff]
    %v206 = vld [vmem:[#allocation2 + $0x510] sm:$0xff]
    %v207 = vld [vmem:[#allocation2 + $0x518] sm:$0xff]
    %v208 = vld [vmem:[#allocation2 + $0x520] sm:$0xff]
    %v209 = vld [vmem:[#allocation2 + $0x528] sm:$0xff]
    %v210 = vld [vmem:[#allocation2 + $0x530] sm:$0xff]
    %v211 = vld [vmem:[#allocation2 + $0x538] sm:$0xff]
    %v212 = vld [vmem:[#allocation2 + $0x540] sm:$0xff]
    %v213 = vld [vmem:[#allocation2 + $0x548] sm:$0xff]
    %v214 = vld [vmem:[#allocation2 + $0x550] sm:$0xff]
    %v215 = vld [vmem:[#allocation2 + $0x558] sm:$0xff]
    %v216 = vld [vmem:[#allocation2 + $0x560] sm:$0xff]
    %v217 = vld [vmem:[#allocation2 + $0x568] sm:$0xff]
    %v218 = vld [vmem:[#allocation2 + $0x570] sm:$0xff]
    %v219 = vld [vmem:[#allocation2 + $0x578] sm:$0xff]
    %v220 = vld [vmem:[#allocation2 + $0x580] sm:$0xff]
    %v221 = vld [vmem:[#allocation2 + $0x588] sm:$0xff]
    %v222 = vld [vmem:[#allocation2 + $0x590] sm:$0xff]
    %v223 = vld [vmem:[#allocation2 + $0x598] sm:$0xff]
    %v224 = vld [vmem:[#allocation2 + $0x5a0] sm:$0xff]
    %v225 = vld [vmem:[#allocation2 + $0x5a8] sm:$0xff]
    %v226 = vld [vmem:[#allocation2 + $0x5b0] sm:$0xff]
    %v227 = vld [vmem:[#allocation2 + $0x5b8] sm:$0xff]
    %v228 = vld [vmem:[#allocation2 + $0x5c0] sm:$0xff]
    %v229 = vld [vmem:[#allocation2 + $0x5c8] sm:$0xff]
    %v230 = vld [vmem:[#allocation2 + $0x5d0] sm:$0xff]
    %v231 = vld [vmem:[#allocation2 + $0x5d8] sm:$0xff]
    %v232 = vld [vmem:[#allocation2 + $0x5e0] sm:$0xff]
    %v233 = vld [vmem:[#allocation2 + $0x5e8] sm:$0xff]
    %v234 = vld [vmem:[#allocation2 + $0x5f0] sm:$0xff]
    %v235 = vld [vmem:[#allocation2 + $0x5f8] sm:$0xff]
    %v236 = vld [vmem:[#allocation2 + $0x600] sm:$0xff]
    %v237 = vld [vmem:[#allocation2 + $0x608] sm:$0xff]
    %v238 = vld [vmem:[#allocation2 + $0x610] sm:$0xff]
    %v239 = vld [vmem:[#allocation2 + $0x618] sm:$0xff]
    %v240 = vld [vmem:[#allocation2 + $0x620] sm:$0xff]
    %v241 = vld [vmem:[#allocation2 + $0x628] sm:$0xff]
    %v242 = vld [vmem:[#allocation2 + $0x630] sm:$0xff]
    %v243 = vld [vmem:[#allocation2 + $0x638] sm:$0xff]
    %v244 = vld [vmem:[#allocation2 + $0x640] sm:$0xff]
    %v245 = vld [vmem:[#allocation2 + $0x648] sm:$0xff]
    %v246 = vld [vmem:[#allocation2 + $0x650] sm:$0xff]
    %v247 = vld [vmem:[#allocation2 + $0x658] sm:$0xff]
    %v248 = vld [vmem:[#allocation2 + $0x660] sm:$0xff]
    %v249 = vld [vmem:[#allocation2 + $0x668] sm:$0xff]
    %v250 = vld [vmem:[#allocation2 + $0x670] sm:$0xff]
    %v251 = vld [vmem:[#allocation2 + $0x678] sm:$0xff]
    %v252 = vld [vmem:[#allocation2 + $0x680] sm:$0xff]
    %v253 = vld [vmem:[#allocation2 + $0x688] sm:$0xff]
    %v254 = vld [vmem:[#allocation2 + $0x690] sm:$0xff]
    %v255 = vld [vmem:[#allocation2 + $0x698] sm:$0xff]
    %v256 = vld [vmem:[#allocation2 + $0x6a0] sm:$0xff]
    %v257 = vld [vmem:[#allocation2 + $0x6a8] sm:$0xff]
    %v258 = vld [vmem:[#allocation2 + $0x6b0] sm:$0xff]
    %v259 = vld [vmem:[#allocation2 + $0x6b8] sm:$0xff]
    %v260 = vld [vmem:[#allocation2 + $0x6c0] sm:$0xff]
    %v261 = vld [vmem:[#allocation2 + $0x6c8] sm:$0xff]
    %v262 = vld [vmem:[#allocation2 + $0x6d0] sm:$0xff]
    %v263 = vld [vmem:[#allocation2 + $0x6d8] sm:$0xff]
    %v264 = vld [vmem:[#allocation2 + $0x6e0] sm:$0xff]
    %v265 = vld [vmem:[#allocation2 + $0x6e8] sm:$0xff]
    %v266 = vld [vmem:[#allocation2 + $0x6f0] sm:$0xff]
    %v267 = vld [vmem:[#allocation2 + $0x6f8] sm:$0xff]
    %v268 = vld [vmem:[#allocation2 + $0x700] sm:$0xff]
    %v269 = vld [vmem:[#allocation2 + $0x708] sm:$0xff]
    %v270 = vld [vmem:[#allocation2 + $0x710] sm:$0xff]
    %v271 = vld [vmem:[#allocation2 + $0x718] sm:$0xff]
    %v272 = vld [vmem:[#allocation2 + $0x720] sm:$0xff]
    %v273 = vld [vmem:[#allocation2 + $0x728] sm:$0xff]
    %v274 = vld [vmem:[#allocation2 + $0x730] sm:$0xff]
    %v275 = vld [vmem:[#allocation2 + $0x738] sm:$0xff]
    %v276 = vld [vmem:[#allocation2 + $0x740] sm:$0xff]
    %v277 = vld [vmem:[#allocation2 + $0x748] sm:$0xff]
    %v278 = vld [vmem:[#allocation2 + $0x750] sm:$0xff]
    %v279 = vld [vmem:[#allocation2 + $0x758] sm:$0xff]
    %v280 = vld [vmem:[#allocation2 + $0x760] sm:$0xff]
    %v281 = vld [vmem:[#allocation2 + $0x768] sm:$0xff]
    %v282 = vld [vmem:[#allocation2 + $0x770] sm:$0xff]
    %v283 = vld [vmem:[#allocation2 + $0x778] sm:$0xff]
    %v284 = vld [vmem:[#allocation2 + $0x780] sm:$0xff]
    %v285 = vld [vmem:[#allocation2 + $0x788] sm:$0xff]
    %v286 = vld [vmem:[#allocation2 + $0x790] sm:$0xff]
    %v287 = vld [vmem:[#allocation2 + $0x798] sm:$0xff]
    %v288 = vld [vmem:[#allocation2 + $0x7a0] sm:$0xff]
    %v289 = vld [vmem:[#allocation2 + $0x7a8] sm:$0xff]
    %v290 = vld [vmem:[#allocation2 + $0x7b0] sm:$0xff]
    %v291 = vld [vmem:[#allocation2 + $0x7b8] sm:$0xff]
    %v292 = vld [vmem:[#allocation2 + $0x7c0] sm:$0xff]
    %v293 = vld [vmem:[#allocation2 + $0x7c8] sm:$0xff]
    %v294 = vld [vmem:[#allocation2 + $0x7d0] sm:$0xff]
    %v295 = vld [vmem:[#allocation2 + $0x7d8] sm:$0xff]
    %v296 = vld [vmem:[#allocation2 + $0x7e0] sm:$0xff]
    %v297 = vld [vmem:[#allocation2 + $0x7e8] sm:$0xff]
    %v298 = vld [vmem:[#allocation2 + $0x7f0] sm:$0xff]
    %v299 = vld [vmem:[#allocation2 + $0x7f8] sm:$0xff]
    %s300 = scalar_lea.vmem [#allocation2], 2048
    %v301 = vld [vmem:[%s300] ss:$8 sm:$0x3]
    %v303 = vlaneseq
    %v304 = vshrl.u32 %v303, 7
    %v305 = vsub.s32 0, %v304
    %v306 = vrot.slane %v301, %v305
    %v307 = vlaneseq
    %v308 = vshrl.u32 %v307, 7
    %v309 = vsub.s32 1, %v308
    %v310 = vrot.slane %v301, %v309
    %v315 = vcombine.high %v42, %v42
    %v317 = vunpack.c.l.s4 1983009808
    %v318 = vunpack.c.0.s8 %v317
    %v319 = vlaneseq
    %v320 = vshrl.u32 %v319, 7
    %v321 = vsub.s32 %v318, %v320
    %v322 = vrot.slane %v42, %v321
    %v324 = vunpack.c.l.s4 1983009808
    %v325 = vunpack.c.0.s8 %v324
    %v326 = vlaneseq
    %v327 = vshrl.u32 %v326, 7
    %v328 = vsub.s32 %v325, %v327
    %v329 = vrot.slane %v315, %v328
    %v330 = vcombine.high %v322, %v322
    %v331 = vcombine.high %v329, %v329
    %v332 = vcombine.high %v43, %v43
    %v334 = vunpack.c.l.s4 1983009808
    %v335 = vunpack.c.0.s8 %v334
    %v336 = vlaneseq
    %v337 = vshrl.u32 %v336, 7
    %v338 = vsub.s32 %v335, %v337
    %v339 = vrot.slane %v43, %v338
    %v341 = vunpack.c.l.s4 1983009808
    %v342 = vunpack.c.0.s8 %v341
    %v343 = vlaneseq
    %v344 = vshrl.u32 %v343, 7
    %v345 = vsub.s32 %v342, %v344
    %v346 = vrot.slane %v332, %v345
    %v347 = vcombine.high %v339, %v339
    %v348 = vcombine.high %v346, %v346
    %357 = vmatprep.subr.mxu0 %v45
    %358 = vmatpush1.msra.mxu0 %v44
    %359 = vmatprep.subr.mxu0 %v47
    %360 = vmatpush1.msra.mxu0 %v46
    %361 = vmatprep.subr.mxu0 %v49
    %362 = vmatpush1.msra.mxu0 %v48
    %363 = vmatprep.subr.mxu0 %v51
    %364 = vmatpush1.msra.mxu0 %v50
    %365 = vmatprep.subr.mxu0 %v53
    %366 = vmatpush1.msra.mxu0 %v52
    %367 = vmatprep.subr.mxu0 %v55
    %368 = vmatpush1.msra.mxu0 %v54
    %369 = vmatprep.subr.mxu0 %v57
    %370 = vmatpush1.msra.mxu0 %v56
    %371 = vmatprep.subr.mxu0 %v59
    %372 = vmatpush1.msra.mxu0 %v58
    %373 = vmatprep.subr.mxu0 %v61
    %374 = vmatpush1.msra.mxu0 %v60
    %375 = vmatprep.subr.mxu0 %v63
    %376 = vmatpush1.msra.mxu0 %v62
    %377 = vmatprep.subr.mxu0 %v65
    %378 = vmatpush1.msra.mxu0 %v64
    %379 = vmatprep.subr.mxu0 %v67
    %380 = vmatpush1.msra.mxu0 %v66
    %381 = vmatprep.subr.mxu0 %v69
    %382 = vmatpush1.msra.mxu0 %v68
    %383 = vmatprep.subr.mxu0 %v71
    %384 = vmatpush1.msra.mxu0 %v70
    %385 = vmatprep.subr.mxu0 %v73
    %386 = vmatpush1.msra.mxu0 %v72
    %387 = vmatprep.subr.mxu0 %v75
    %388 = vmatpush1.msra.mxu0 %v74
    %389 = vmatprep.subr.mxu0 %v77
    %390 = vmatpush1.msra.mxu0 %v76
    %391 = vmatprep.subr.mxu0 %v79
    %392 = vmatpush1.msra.mxu0 %v78
    %393 = vmatprep.subr.mxu0 %v81
    %394 = vmatpush1.msra.mxu0 %v80
    %395 = vmatprep.subr.mxu0 %v83
    %396 = vmatpush1.msra.mxu0 %v82
    %397 = vmatprep.subr.mxu0 %v85
    %398 = vmatpush1.msra.mxu0 %v84
    %399 = vmatprep.subr.mxu0 %v87
    %400 = vmatpush1.msra.mxu0 %v86
    %401 = vmatprep.subr.mxu0 %v89
    %402 = vmatpush1.msra.mxu0 %v88
    %403 = vmatprep.subr.mxu0 %v91
    %404 = vmatpush1.msra.mxu0 %v90
    %405 = vmatprep.subr.mxu0 %v93
    %406 = vmatpush1.msra.mxu0 %v92
    %407 = vmatprep.subr.mxu0 %v95
    %408 = vmatpush1.msra.mxu0 %v94
    %409 = vmatprep.subr.mxu0 %v97
    %410 = vmatpush1.msra.mxu0 %v96
    %411 = vmatprep.subr.mxu0 %v99
    %412 = vmatpush1.msra.mxu0 %v98
    %413 = vmatprep.subr.mxu0 %v101
    %414 = vmatpush1.msra.mxu0 %v100
    %415 = vmatprep.subr.mxu0 %v103
    %416 = vmatpush1.msra.mxu0 %v102
    %417 = vmatprep.subr.mxu0 %v105
    %418 = vmatpush1.msra.mxu0 %v104
    %419 = vmatprep.subr.mxu0 %v107
    %420 = vmatpush1.msra.mxu0 %v106
    %421 = vmatprep.mubr.f32.mxu0 %v330
    %422 = vmatmul.mubr.f32.gmra.mrb[0].mxu0 %v322
    %v423 = vpop.f32.mrb[0].mxu0
    %v424 = vadd.f32 %v306, %v423
    %v425 = vpop.f32.mrb[0].mxu0
    %v426 = vadd.f32 %v310, %v425
    %427 = vdwg.mxu0
    %428 = vmatprep.subr.mxu0 %v109
    %429 = vmatpush1.msra.mxu0 %v108
    %430 = vmatprep.subr.mxu0 %v111
    %431 = vmatpush1.msra.mxu0 %v110
    %432 = vmatprep.subr.mxu0 %v113
    %433 = vmatpush1.msra.mxu0 %v112
    %434 = vmatprep.subr.mxu0 %v115
    %435 = vmatpush1.msra.mxu0 %v114
    %436 = vmatprep.subr.mxu0 %v117
    %437 = vmatpush1.msra.mxu0 %v116
    %438 = vmatprep.subr.mxu0 %v119
    %439 = vmatpush1.msra.mxu0 %v118
    %440 = vmatprep.subr.mxu0 %v121
    %441 = vmatpush1.msra.mxu0 %v120
    %442 = vmatprep.subr.mxu0 %v123
    %443 = vmatpush1.msra.mxu0 %v122
    %444 = vmatprep.subr.mxu0 %v125
    %445 = vmatpush1.msra.mxu0 %v124
    %446 = vmatprep.subr.mxu0 %v127
    %447 = vmatpush1.msra.mxu0 %v126
    %448 = vmatprep.subr.mxu0 %v129
    %449 = vmatpush1.msra.mxu0 %v128
    %450 = vmatprep.subr.mxu0 %v131
    %451 = vmatpush1.msra.mxu0 %v130
    %452 = vmatprep.subr.mxu0 %v133
    %453 = vmatpush1.msra.mxu0 %v132
    %454 = vmatprep.subr.mxu0 %v135
    %455 = vmatpush1.msra.mxu0 %v134
    %456 = vmatprep.subr.mxu0 %v137
    %457 = vmatpush1.msra.mxu0 %v136
    %458 = vmatprep.subr.mxu0 %v139
    %459 = vmatpush1.msra.mxu0 %v138
    %460 = vmatprep.subr.mxu0 %v141
    %461 = vmatpush1.msra.mxu0 %v140
    %462 = vmatprep.subr.mxu0 %v143
    %463 = vmatpush1.msra.mxu0 %v142
    %464 = vmatprep.subr.mxu0 %v145
    %465 = vmatpush1.msra.mxu0 %v144
    %466 = vmatprep.subr.mxu0 %v147
    %467 = vmatpush1.msra.mxu0 %v146
    %468 = vmatprep.subr.mxu0 %v149
    %469 = vmatpush1.msra.mxu0 %v148
    %470 = vmatprep.subr.mxu0 %v151
    %471 = vmatpush1.msra.mxu0 %v150
    %472 = vmatprep.subr.mxu0 %v153
    %473 = vmatpush1.msra.mxu0 %v152
    %474 = vmatprep.subr.mxu0 %v155
    %475 = vmatpush1.msra.mxu0 %v154
    %476 = vmatprep.subr.mxu0 %v157
    %477 = vmatpush1.msra.mxu0 %v156
    %478 = vmatprep.subr.mxu0 %v159
    %479 = vmatpush1.msra.mxu0 %v158
    %480 = vmatprep.subr.mxu0 %v161
    %481 = vmatpush1.msra.mxu0 %v160
    %482 = vmatprep.subr.mxu0 %v163
    %483 = vmatpush1.msra.mxu0 %v162
    %484 = vmatprep.subr.mxu0 %v165
    %485 = vmatpush1.msra.mxu0 %v164
    %486 = vmatprep.subr.mxu0 %v167
    %487 = vmatpush1.msra.mxu0 %v166
    %488 = vmatprep.subr.mxu0 %v169
    %489 = vmatpush1.msra.mxu0 %v168
    %490 = vmatprep.subr.mxu0 %v171
    %491 = vmatpush1.msra.mxu0 %v170
    %492 = vmatprep.mubr.f32.mxu0 %v331
    %493 = vmatmul.mubr.f32.gmra.mrb[0].mxu0 %v329
    %v494 = vpop.f32.mrb[0].mxu0
    %v495 = vadd.f32 %v424, %v494
    %v496 = vpop.f32.mrb[0].mxu0
    %v497 = vadd.f32 %v426, %v496
    %498 = vdwg.mxu0
    %499 = vmatprep.subr.mxu0 %v173
    %500 = vmatpush1.msra.mxu0 %v172
    %501 = vmatprep.subr.mxu0 %v175
    %502 = vmatpush1.msra.mxu0 %v174
    %503 = vmatprep.subr.mxu0 %v177
    %504 = vmatpush1.msra.mxu0 %v176
    %505 = vmatprep.subr.mxu0 %v179
    %506 = vmatpush1.msra.mxu0 %v178
    %507 = vmatprep.subr.mxu0 %v181
    %508 = vmatpush1.msra.mxu0 %v180
    %509 = vmatprep.subr.mxu0 %v183
    %510 = vmatpush1.msra.mxu0 %v182
    %511 = vmatprep.subr.mxu0 %v185
    %512 = vmatpush1.msra.mxu0 %v184
    %513 = vmatprep.subr.mxu0 %v187
    %514 = vmatpush1.msra.mxu0 %v186
    %515 = vmatprep.subr.mxu0 %v189
    %516 = vmatpush1.msra.mxu0 %v188
    %517 = vmatprep.subr.mxu0 %v191
    %518 = vmatpush1.msra.mxu0 %v190
    %519 = vmatprep.subr.mxu0 %v193
    %520 = vmatpush1.msra.mxu0 %v192
    %521 = vmatprep.subr.mxu0 %v195
    %522 = vmatpush1.msra.mxu0 %v194
    %523 = vmatprep.subr.mxu0 %v197
    %524 = vmatpush1.msra.mxu0 %v196
    %525 = vmatprep.subr.mxu0 %v199
    %526 = vmatpush1.msra.mxu0 %v198
    %527 = vmatprep.subr.mxu0 %v201
    %528 = vmatpush1.msra.mxu0 %v200
    %529 = vmatprep.subr.mxu0 %v203
    %530 = vmatpush1.msra.mxu0 %v202
    %531 = vmatprep.subr.mxu0 %v205
    %532 = vmatpush1.msra.mxu0 %v204
    %533 = vmatprep.subr.mxu0 %v207
    %534 = vmatpush1.msra.mxu0 %v206
    %535 = vmatprep.subr.mxu0 %v209
    %536 = vmatpush1.msra.mxu0 %v208
    %537 = vmatprep.subr.mxu0 %v211
    %538 = vmatpush1.msra.mxu0 %v210
    %539 = vmatprep.subr.mxu0 %v213
    %540 = vmatpush1.msra.mxu0 %v212
    %541 = vmatprep.subr.mxu0 %v215
    %542 = vmatpush1.msra.mxu0 %v214
    %543 = vmatprep.subr.mxu0 %v217
    %544 = vmatpush1.msra.mxu0 %v216
    %545 = vmatprep.subr.mxu0 %v219
    %546 = vmatpush1.msra.mxu0 %v218
    %547 = vmatprep.subr.mxu0 %v221
    %548 = vmatpush1.msra.mxu0 %v220
    %549 = vmatprep.subr.mxu0 %v223
    %550 = vmatpush1.msra.mxu0 %v222
    %551 = vmatprep.subr.mxu0 %v225
    %552 = vmatpush1.msra.mxu0 %v224
    %553 = vmatprep.subr.mxu0 %v227
    %554 = vmatpush1.msra.mxu0 %v226
    %555 = vmatprep.subr.mxu0 %v229
    %556 = vmatpush1.msra.mxu0 %v228
    %557 = vmatprep.subr.mxu0 %v231
    %558 = vmatpush1.msra.mxu0 %v230
    %559 = vmatprep.subr.mxu0 %v233
    %560 = vmatpush1.msra.mxu0 %v232
    %561 = vmatprep.subr.mxu0 %v235
    %562 = vmatpush1.msra.mxu0 %v234
    %563 = vmatprep.mubr.f32.mxu0 %v347
    %564 = vmatmul.mubr.f32.gmra.mrb[0].mxu0 %v339
    %v565 = vpop.f32.mrb[0].mxu0
    %v566 = vadd.f32 %v495, %v565
    %v567 = vpop.f32.mrb[0].mxu0
    %v568 = vadd.f32 %v497, %v567
    %569 = vdwg.mxu0
    %570 = vmatprep.subr.mxu0 %v237
    %571 = vmatpush1.msra.mxu0 %v236
    %572 = vmatprep.subr.mxu0 %v239
    %573 = vmatpush1.msra.mxu0 %v238
    %574 = vmatprep.subr.mxu0 %v241
    %575 = vmatpush1.msra.mxu0 %v240
    %576 = vmatprep.subr.mxu0 %v243
    %577 = vmatpush1.msra.mxu0 %v242
    %578 = vmatprep.subr.mxu0 %v245
    %579 = vmatpush1.msra.mxu0 %v244
    %580 = vmatprep.subr.mxu0 %v247
    %581 = vmatpush1.msra.mxu0 %v246
    %582 = vmatprep.subr.mxu0 %v249
    %583 = vmatpush1.msra.mxu0 %v248
    %584 = vmatprep.subr.mxu0 %v251
    %585 = vmatpush1.msra.mxu0 %v250
    %586 = vmatprep.subr.mxu0 %v253
    %587 = vmatpush1.msra.mxu0 %v252
    %588 = vmatprep.subr.mxu0 %v255
    %589 = vmatpush1.msra.mxu0 %v254
    %590 = vmatprep.subr.mxu0 %v257
    %591 = vmatpush1.msra.mxu0 %v256
    %592 = vmatprep.subr.mxu0 %v259
    %593 = vmatpush1.msra.mxu0 %v258
    %594 = vmatprep.subr.mxu0 %v261
    %595 = vmatpush1.msra.mxu0 %v260
    %596 = vmatprep.subr.mxu0 %v263
    %597 = vmatpush1.msra.mxu0 %v262
    %598 = vmatprep.subr.mxu0 %v265
    %599 = vmatpush1.msra.mxu0 %v264
    %600 = vmatprep.subr.mxu0 %v267
    %601 = vmatpush1.msra.mxu0 %v266
    %602 = vmatprep.subr.mxu0 %v269
    %603 = vmatpush1.msra.mxu0 %v268
    %604 = vmatprep.subr.mxu0 %v271
    %605 = vmatpush1.msra.mxu0 %v270
    %606 = vmatprep.subr.mxu0 %v273
    %607 = vmatpush1.msra.mxu0 %v272
    %608 = vmatprep.subr.mxu0 %v275
    %609 = vmatpush1.msra.mxu0 %v274
    %610 = vmatprep.subr.mxu0 %v277
    %611 = vmatpush1.msra.mxu0 %v276
    %612 = vmatprep.subr.mxu0 %v279
    %613 = vmatpush1.msra.mxu0 %v278
    %614 = vmatprep.subr.mxu0 %v281
    %615 = vmatpush1.msra.mxu0 %v280
    %616 = vmatprep.subr.mxu0 %v283
    %617 = vmatpush1.msra.mxu0 %v282
    %618 = vmatprep.subr.mxu0 %v285
    %619 = vmatpush1.msra.mxu0 %v284
    %620 = vmatprep.subr.mxu0 %v287
    %621 = vmatpush1.msra.mxu0 %v286
    %622 = vmatprep.subr.mxu0 %v289
    %623 = vmatpush1.msra.mxu0 %v288
    %624 = vmatprep.subr.mxu0 %v291
    %625 = vmatpush1.msra.mxu0 %v290
    %626 = vmatprep.subr.mxu0 %v293
    %627 = vmatpush1.msra.mxu0 %v292
    %628 = vmatprep.subr.mxu0 %v295
    %629 = vmatpush1.msra.mxu0 %v294
    %630 = vmatprep.subr.mxu0 %v297
    %631 = vmatpush1.msra.mxu0 %v296
    %632 = vmatprep.subr.mxu0 %v299
    %633 = vmatpush1.msra.mxu0 %v298
    %634 = vmatprep.mubr.f32.mxu0 %v348
    %635 = vmatmul.mubr.f32.gmra.mrb[0].mxu0 %v346
    %v636 = vpop.f32.mrb[0].mxu0
    %v637 = vadd.f32 %v566, %v636
    %v638 = vpop.f32.mrb[0].mxu0
    %v639 = vadd.f32 %v568, %v638
    %640 = vdwg.mxu0
    %v641 = vmax.f32 %v637, 0.0
    %v642 = vmax.f32 %v639, 0.0
    %v643 = vld [vmem:[#allocation4] sm:$0xff]
    %v644 = vld [vmem:[#allocation4 + $0x8] sm:$0xff]
    %v645 = vld [vmem:[#allocation4 + $0x10] sm:$0xff]
    %v646 = vld [vmem:[#allocation4 + $0x18] sm:$0xff]
    %v647 = vld [vmem:[#allocation4 + $0x20] sm:$0xff]
    %v648 = vld [vmem:[#allocation4 + $0x28] sm:$0xff]
    %v649 = vld [vmem:[#allocation4 + $0x30] sm:$0xff]
    %v650 = vld [vmem:[#allocation4 + $0x38] sm:$0xff]
    %v651 = vld [vmem:[#allocation4 + $0x40] sm:$0xff]
    %v652 = vld [vmem:[#allocation4 + $0x48] sm:$0xff]
    %v653 = vld [vmem:[#allocation4 + $0x50] sm:$0xff]
    %v654 = vld [vmem:[#allocation4 + $0x58] sm:$0xff]
    %v655 = vld [vmem:[#allocation4 + $0x60] sm:$0xff]
    %v656 = vld [vmem:[#allocation4 + $0x68] sm:$0xff]
    %v657 = vld [vmem:[#allocation4 + $0x70] sm:$0xff]
    %v658 = vld [vmem:[#allocation4 + $0x78] sm:$0xff]
    %v659 = vld [vmem:[#allocation4 + $0x80] sm:$0xff]
    %v660 = vld [vmem:[#allocation4 + $0x88] sm:$0xff]
    %v661 = vld [vmem:[#allocation4 + $0x90] sm:$0xff]
    %v662 = vld [vmem:[#allocation4 + $0x98] sm:$0xff]
    %v663 = vld [vmem:[#allocation4 + $0xa0] sm:$0xff]
    %v664 = vld [vmem:[#allocation4 + $0xa8] sm:$0xff]
    %v665 = vld [vmem:[#allocation4 + $0xb0] sm:$0xff]
    %v666 = vld [vmem:[#allocation4 + $0xb8] sm:$0xff]
    %v667 = vld [vmem:[#allocation4 + $0xc0] sm:$0xff]
    %v668 = vld [vmem:[#allocation4 + $0xc8] sm:$0xff]
    %v669 = vld [vmem:[#allocation4 + $0xd0] sm:$0xff]
    %v670 = vld [vmem:[#allocation4 + $0xd8] sm:$0xff]
    %v671 = vld [vmem:[#allocation4 + $0xe0] sm:$0xff]
    %v672 = vld [vmem:[#allocation4 + $0xe8] sm:$0xff]
    %v673 = vld [vmem:[#allocation4 + $0xf0] sm:$0xff]
    %v674 = vld [vmem:[#allocation4 + $0xf8] sm:$0xff]
    %v675 = vld [vmem:[#allocation4 + $0x100] sm:$0x1]
    %v676 = vlaneseq
    %v677 = vshrl.u32 %v676, 7
    %v678 = vsub.s32 0, %v677
    %v679 = vrot.slane %v675, %v678
    %680 = vmatprep.subr.mxu0 0.0
    %681 = vmatpush1.msra.mxu0 %v643
    %682 = vmatprep.subr.mxu0 0.0
    %683 = vmatpush1.msra.mxu0 %v644
    %684 = vmatprep.subr.mxu0 0.0
    %685 = vmatpush1.msra.mxu0 %v645
    %686 = vmatprep.subr.mxu0 0.0
    %687 = vmatpush1.msra.mxu0 %v646
    %688 = vmatprep.subr.mxu0 0.0
    %689 = vmatpush1.msra.mxu0 %v647
    %690 = vmatprep.subr.mxu0 0.0
    %691 = vmatpush1.msra.mxu0 %v648
    %692 = vmatprep.subr.mxu0 0.0
    %693 = vmatpush1.msra.mxu0 %v649
    %694 = vmatprep.subr.mxu0 0.0
    %695 = vmatpush1.msra.mxu0 %v650
    %696 = vmatprep.subr.mxu0 0.0
    %697 = vmatpush1.msra.mxu0 %v651
    %698 = vmatprep.subr.mxu0 0.0
    %699 = vmatpush1.msra.mxu0 %v652
    %700 = vmatprep.subr.mxu0 0.0
    %701 = vmatpush1.msra.mxu0 %v653
    %702 = vmatprep.subr.mxu0 0.0
    %703 = vmatpush1.msra.mxu0 %v654
    %704 = vmatprep.subr.mxu0 0.0
    %705 = vmatpush1.msra.mxu0 %v655
    %706 = vmatprep.subr.mxu0 0.0
    %707 = vmatpush1.msra.mxu0 %v656
    %708 = vmatprep.subr.mxu0 0.0
    %709 = vmatpush1.msra.mxu0 %v657
    %710 = vmatprep.subr.mxu0 0.0
    %711 = vmatpush1.msra.mxu0 %v658
    %712 = vmatprep.subr.mxu0 0.0
    %713 = vmatpush1.msra.mxu0 %v659
    %714 = vmatprep.subr.mxu0 0.0
    %715 = vmatpush1.msra.mxu0 %v660
    %716 = vmatprep.subr.mxu0 0.0
    %717 = vmatpush1.msra.mxu0 %v661
    %718 = vmatprep.subr.mxu0 0.0
    %719 = vmatpush1.msra.mxu0 %v662
    %720 = vmatprep.subr.mxu0 0.0
    %721 = vmatpush1.msra.mxu0 %v663
    %722 = vmatprep.subr.mxu0 0.0
    %723 = vmatpush1.msra.mxu0 %v664
    %724 = vmatprep.subr.mxu0 0.0
    %725 = vmatpush1.msra.mxu0 %v665
    %726 = vmatprep.subr.mxu0 0.0
    %727 = vmatpush1.msra.mxu0 %v666
    %728 = vmatprep.subr.mxu0 0.0
    %729 = vmatpush1.msra.mxu0 %v667
    %730 = vmatprep.subr.mxu0 0.0
    %731 = vmatpush1.msra.mxu0 %v668
    %732 = vmatprep.subr.mxu0 0.0
    %733 = vmatpush1.msra.mxu0 %v669
    %734 = vmatprep.subr.mxu0 0.0
    %735 = vmatpush1.msra.mxu0 %v670
    %736 = vmatprep.subr.mxu0 0.0
    %737 = vmatpush1.msra.mxu0 %v671
    %738 = vmatprep.subr.mxu0 0.0
    %739 = vmatpush1.msra.mxu0 %v672
    %740 = vmatprep.subr.mxu0 0.0
    %741 = vmatpush1.msra.mxu0 %v673
    %742 = vmatprep.subr.mxu0 0.0
    %743 = vmatpush1.msra.mxu0 %v674
    %744 = vmatprep.mubr.f32.mxu0 %v642
    %745 = vmatmul.mubr.f32.gmra.mrb[0].mxu0 %v641
    %v746 = vpop.f32.mrb[0].mxu0
    %v747 = vadd.f32 %v679, %v746
    %v748 = vpop.f32.mrb[0].mxu0
    %749 = vdwg.mxu0
    %v750 = vmax.f32 %v747, 0.0
    %v751 = vld [vmem:[#allocation4 + $0x108] sm:$0xff]
    %v752 = vld [vmem:[#allocation4 + $0x110] sm:$0xff]
    %v753 = vld [vmem:[#allocation4 + $0x118] sm:$0xff]
    %v754 = vld [vmem:[#allocation4 + $0x120] sm:$0xff]
    %v755 = vld [vmem:[#allocation4 + $0x128] sm:$0xff]
    %v756 = vld [vmem:[#allocation4 + $0x130] sm:$0xff]
    %v757 = vld [vmem:[#allocation4 + $0x138] sm:$0xff]
    %v758 = vld [vmem:[#allocation4 + $0x140] sm:$0xff]
    %v759 = vld [vmem:[#allocation4 + $0x148] sm:$0xff]
    %v760 = vld [vmem:[#allocation4 + $0x150] sm:$0xff]
    %v761 = vld [vmem:[#allocation4 + $0x158] sm:$0xff]
    %v762 = vld [vmem:[#allocation4 + $0x160] sm:$0xff]
    %v763 = vld [vmem:[#allocation4 + $0x168] sm:$0xff]
    %v764 = vld [vmem:[#allocation4 + $0x170] sm:$0xff]
    %v765 = vld [vmem:[#allocation4 + $0x178] sm:$0xff]
    %v766 = vld [vmem:[#allocation4 + $0x180] sm:$0xff]
    %v767 = vld [vmem:[#allocation4 + $0x188] sm:$0x1]
    %v768 = vlaneseq
    %v769 = vshrl.u32 %v768, 7
    %v770 = vsub.s32 0, %v769
    %v771 = vrot.slane %v767, %v770
    %772 = vmatprep.subr.mxu0 0.0
    %773 = vmatpush1.msra.mxu0 %v751
    %774 = vmatprep.subr.mxu0 0.0
    %775 = vmatpush1.msra.mxu0 %v752
    %776 = vmatprep.subr.mxu0 0.0
    %777 = vmatpush1.msra.mxu0 %v753
    %778 = vmatprep.subr.mxu0 0.0
    %779 = vmatpush1.msra.mxu0 %v754
    %780 = vmatprep.subr.mxu0 0.0
    %781 = vmatpush1.msra.mxu0 %v755
    %782 = vmatprep.subr.mxu0 0.0
    %783 = vmatpush1.msra.mxu0 %v756
    %784 = vmatprep.subr.mxu0 0.0
    %785 = vmatpush1.msra.mxu0 %v757
    %786 = vmatprep.subr.mxu0 0.0
    %787 = vmatpush1.msra.mxu0 %v758
    %788 = vmatprep.subr.mxu0 0.0
    %789 = vmatpush1.msra.mxu0 %v759
    %790 = vmatprep.subr.mxu0 0.0
    %791 = vmatpush1.msra.mxu0 %v760
    %792 = vmatprep.subr.mxu0 0.0
    %793 = vmatpush1.msra.mxu0 %v761
    %794 = vmatprep.subr.mxu0 0.0
    %795 = vmatpush1.msra.mxu0 %v762
    %796 = vmatprep.subr.mxu0 0.0
    %797 = vmatpush1.msra.mxu0 %v763
    %798 = vmatprep.subr.mxu0 0.0
    %799 = vmatpush1.msra.mxu0 %v764
    %800 = vmatprep.subr.mxu0 0.0
    %801 = vmatpush1.msra.mxu0 %v765
    %802 = vmatprep.subr.mxu0 0.0
    %803 = vmatpush1.msra.mxu0 %v766
    %804 = vmatprep.subr.mxu0 0.0
    %805 = vmatpush1.msra.mxu0 0.0
    %806 = vmatprep.subr.mxu0 0.0
    %807 = vmatpush1.msra.mxu0 0.0
    %808 = vmatprep.subr.mxu0 0.0
    %809 = vmatpush1.msra.mxu0 0.0
    %810 = vmatprep.subr.mxu0 0.0
    %811 = vmatpush1.msra.mxu0 0.0
    %812 = vmatprep.subr.mxu0 0.0
    %813 = vmatpush1.msra.mxu0 0.0
    %814 = vmatprep.subr.mxu0 0.0
    %815 = vmatpush1.msra.mxu0 0.0
    %816 = vmatprep.subr.mxu0 0.0
    %817 = vmatpush1.msra.mxu0 0.0
    %818 = vmatprep.subr.mxu0 0.0
    %819 = vmatpush1.msra.mxu0 0.0
    %820 = vmatprep.subr.mxu0 0.0
    %821 = vmatpush1.msra.mxu0 0.0
    %822 = vmatprep.subr.mxu0 0.0
    %823 = vmatpush1.msra.mxu0 0.0
    %824 = vmatprep.subr.mxu0 0.0
    %825 = vmatpush1.msra.mxu0 0.0
    %826 = vmatprep.subr.mxu0 0.0
    %827 = vmatpush1.msra.mxu0 0.0
    %828 = vmatprep.subr.mxu0 0.0
    %829 = vmatpush1.msra.mxu0 0.0
    %830 = vmatprep.subr.mxu0 0.0
    %831 = vmatpush1.msra.mxu0 0.0
    %832 = vmatprep.subr.mxu0 0.0
    %833 = vmatpush1.msra.mxu0 0.0
    %834 = vmatprep.subr.mxu0 0.0
    %835 = vmatpush1.msra.mxu0 0.0
    %836 = vmatprep.mubr.f32.mxu0 0.0
    %837 = vmatmul.mubr.f32.gmra.mrb[0].mxu0 %v750
    %v838 = vpop.f32.mrb[0].mxu0
    %v839 = vadd.f32 %v771, %v838
    %v840 = vpop.f32.mrb[0].mxu0
    %841 = vdwg.mxu0
    %v842 = vmax.f32 %v839, 0.0
    %v843 = vld [vmem:[#allocation4 + $0x190] sm:$0xff]
    %v844 = vld [vmem:[#allocation4 + $0x198] sm:$0xff]
    %v845 = vld [vmem:[#allocation4 + $0x1a0] sm:$0xff]
    %v846 = vld [vmem:[#allocation4 + $0x1a8] sm:$0xff]
    %v847 = vld [vmem:[#allocation4 + $0x1b0] sm:$0xff]
    %v848 = vld [vmem:[#allocation4 + $0x1b8] sm:$0xff]
    %v849 = vld [vmem:[#allocation4 + $0x1c0] sm:$0xff]
    %v850 = vld [vmem:[#allocation4 + $0x1c8] sm:$0xff]
    %v851 = vld [vmem:[#allocation4 + $0x1d0] sm:$0xff]
    %v852 = vld [vmem:[#allocation4 + $0x1d8] sm:$0xff]
    %v853 = vld [vmem:[#allocation4 + $0x1e0] sm:$0xff]
    %v854 = vld [vmem:[#allocation4 + $0x1e8] sm:$0xff]
    %v855 = vld [vmem:[#allocation4 + $0x1f0] sm:$0xff]
    %v856 = vld [vmem:[#allocation4 + $0x1f8] sm:$0xff]
    %v857 = vld [vmem:[#allocation4 + $0x200] sm:$0xff]
    %v858 = vld [vmem:[#allocation4 + $0x208] sm:$0xff]
    %v859 = vld [vmem:[#allocation4 + $0x210] sm:$0x1]
    %v860 = vlaneseq
    %v861 = vshrl.u32 %v860, 7
    %v862 = vsub.s32 0, %v861
    %v863 = vrot.slane %v859, %v862
    %864 = vmatprep.subr.mxu0 0.0
    %865 = vmatpush1.msra.mxu0 %v843
    %866 = vmatprep.subr.mxu0 0.0
    %867 = vmatpush1.msra.mxu0 %v844
    %868 = vmatprep.subr.mxu0 0.0
    %869 = vmatpush1.msra.mxu0 %v845
    %870 = vmatprep.subr.mxu0 0.0
    %871 = vmatpush1.msra.mxu0 %v846
    %872 = vmatprep.subr.mxu0 0.0
    %873 = vmatpush1.msra.mxu0 %v847
    %874 = vmatprep.subr.mxu0 0.0
    %875 = vmatpush1.msra.mxu0 %v848
    %876 = vmatprep.subr.mxu0 0.0
    %877 = vmatpush1.msra.mxu0 %v849
    %878 = vmatprep.subr.mxu0 0.0
    %879 = vmatpush1.msra.mxu0 %v850
    %880 = vmatprep.subr.mxu0 0.0
    %881 = vmatpush1.msra.mxu0 %v851
    %882 = vmatprep.subr.mxu0 0.0
    %883 = vmatpush1.msra.mxu0 %v852
    %884 = vmatprep.subr.mxu0 0.0
    %885 = vmatpush1.msra.mxu0 %v853
    %886 = vmatprep.subr.mxu0 0.0
    %887 = vmatpush1.msra.mxu0 %v854
    %888 = vmatprep.subr.mxu0 0.0
    %889 = vmatpush1.msra.mxu0 %v855
    %890 = vmatprep.subr.mxu0 0.0
    %891 = vmatpush1.msra.mxu0 %v856
    %892 = vmatprep.subr.mxu0 0.0
    %893 = vmatpush1.msra.mxu0 %v857
    %894 = vmatprep.subr.mxu0 0.0
    %895 = vmatpush1.msra.mxu0 %v858
    %896 = vmatprep.subr.mxu0 0.0
    %897 = vmatpush1.msra.mxu0 0.0
    %898 = vmatprep.subr.mxu0 0.0
    %899 = vmatpush1.msra.mxu0 0.0
    %900 = vmatprep.subr.mxu0 0.0
    %901 = vmatpush1.msra.mxu0 0.0
    %902 = vmatprep.subr.mxu0 0.0
    %903 = vmatpush1.msra.mxu0 0.0
    %904 = vmatprep.subr.mxu0 0.0
    %905 = vmatpush1.msra.mxu0 0.0
    %906 = vmatprep.subr.mxu0 0.0
    %907 = vmatpush1.msra.mxu0 0.0
    %908 = vmatprep.subr.mxu0 0.0
    %909 = vmatpush1.msra.mxu0 0.0
    %910 = vmatprep.subr.mxu0 0.0
    %911 = vmatpush1.msra.mxu0 0.0
    %912 = vmatprep.subr.mxu0 0.0
    %913 = vmatpush1.msra.mxu0 0.0
    %914 = vmatprep.subr.mxu0 0.0
    %915 = vmatpush1.msra.mxu0 0.0
    %916 = vmatprep.subr.mxu0 0.0
    %917 = vmatpush1.msra.mxu0 0.0
    %918 = vmatprep.subr.mxu0 0.0
    %919 = vmatpush1.msra.mxu0 0.0
    %920 = vmatprep.subr.mxu0 0.0
    %921 = vmatpush1.msra.mxu0 0.0
    %922 = vmatprep.subr.mxu0 0.0
    %923 = vmatpush1.msra.mxu0 0.0
    %924 = vmatprep.subr.mxu0 0.0
    %925 = vmatpush1.msra.mxu0 0.0
    %926 = vmatprep.subr.mxu0 0.0
    %927 = vmatpush1.msra.mxu0 0.0
    %928 = vmatprep.mubr.f32.mxu0 0.0
    %929 = vmatmul.mubr.f32.gmra.mrb[0].mxu0 %v842
    %v930 = vpop.f32.mrb[0].mxu0
    %v931 = vadd.f32 %v863, %v930
    %v932 = vpop.f32.mrb[0].mxu0
    %933 = vdwg.mxu0
    %v934 = vmax.f32 %v931, 0.0
    %v935 = vld [vmem:[#allocation4 + $0x218] sm:$0xff]
    %v936 = vld [vmem:[#allocation4 + $0x220] sm:$0xff]
    %v937 = vld [vmem:[#allocation4 + $0x228] sm:$0xff]
    %v938 = vld [vmem:[#allocation4 + $0x230] sm:$0xff]
    %v939 = vld [vmem:[#allocation4 + $0x238] sm:$0xff]
    %v940 = vld [vmem:[#allocation4 + $0x240] sm:$0xff]
    %v941 = vld [vmem:[#allocation4 + $0x248] sm:$0xff]
    %v942 = vld [vmem:[#allocation4 + $0x250] sm:$0xff]
    %v943 = vld [vmem:[#allocation4 + $0x258] sm:$0xff]
    %v944 = vld [vmem:[#allocation4 + $0x260] sm:$0xff]
    %v945 = vld [vmem:[#allocation4 + $0x268] sm:$0xff]
    %v946 = vld [vmem:[#allocation4 + $0x270] sm:$0xff]
    %v947 = vld [vmem:[#allocation4 + $0x278] sm:$0xff]
    %v948 = vld [vmem:[#allocation4 + $0x280] sm:$0xff]
    %v949 = vld [vmem:[#allocation4 + $0x288] sm:$0xff]
    %v950 = vld [vmem:[#allocation4 + $0x290] sm:$0xff]
    %v951 = vld [vmem:[#allocation4 + $0x298] sm:$0x1]
    %v952 = vlaneseq
    %v953 = vshrl.u32 %v952, 7
    %v954 = vsub.s32 0, %v953
    %v955 = vrot.slane %v951, %v954
    %956 = vmatprep.subr.mxu0 0.0
    %957 = vmatpush1.msra.mxu0 %v935
    %958 = vmatprep.subr.mxu0 0.0
    %959 = vmatpush1.msra.mxu0 %v936
    %960 = vmatprep.subr.mxu0 0.0
    %961 = vmatpush1.msra.mxu0 %v937
    %962 = vmatprep.subr.mxu0 0.0
    %963 = vmatpush1.msra.mxu0 %v938
    %964 = vmatprep.subr.mxu0 0.0
    %965 = vmatpush1.msra.mxu0 %v939
    %966 = vmatprep.subr.mxu0 0.0
    %967 = vmatpush1.msra.mxu0 %v940
    %968 = vmatprep.subr.mxu0 0.0
    %969 = vmatpush1.msra.mxu0 %v941
    %970 = vmatprep.subr.mxu0 0.0
    %971 = vmatpush1.msra.mxu0 %v942
    %972 = vmatprep.subr.mxu0 0.0
    %973 = vmatpush1.msra.mxu0 %v943
    %974 = vmatprep.subr.mxu0 0.0
    %975 = vmatpush1.msra.mxu0 %v944
    %976 = vmatprep.subr.mxu0 0.0
    %977 = vmatpush1.msra.mxu0 %v945
    %978 = vmatprep.subr.mxu0 0.0
    %979 = vmatpush1.msra.mxu0 %v946
    %980 = vmatprep.subr.mxu0 0.0
    %981 = vmatpush1.msra.mxu0 %v947
    %982 = vmatprep.subr.mxu0 0.0
    %983 = vmatpush1.msra.mxu0 %v948
    %984 = vmatprep.subr.mxu0 0.0
    %985 = vmatpush1.msra.mxu0 %v949
    %986 = vmatprep.subr.mxu0 0.0
    %987 = vmatpush1.msra.mxu0 %v950
    %988 = vmatprep.subr.mxu0 0.0
    %989 = vmatpush1.msra.mxu0 0.0
    %990 = vmatprep.subr.mxu0 0.0
    %991 = vmatpush1.msra.mxu0 0.0
    %992 = vmatprep.subr.mxu0 0.0
    %993 = vmatpush1.msra.mxu0 0.0
    %994 = vmatprep.subr.mxu0 0.0
    %995 = vmatpush1.msra.mxu0 0.0
    %996 = vmatprep.subr.mxu0 0.0
    %997 = vmatpush1.msra.mxu0 0.0
    %998 = vmatprep.subr.mxu0 0.0
    %999 = vmatpush1.msra.mxu0 0.0
    %1000 = vmatprep.subr.mxu0 0.0
    %1001 = vmatpush1.msra.mxu0 0.0
    %1002 = vmatprep.subr.mxu0 0.0
    %1003 = vmatpush1.msra.mxu0 0.0
    %1004 = vmatprep.subr.mxu0 0.0
    %1005 = vmatpush1.msra.mxu0 0.0
    %1006 = vmatprep.subr.mxu0 0.0
    %1007 = vmatpush1.msra.mxu0 0.0
    %1008 = vmatprep.subr.mxu0 0.0
    %1009 = vmatpush1.msra.mxu0 0.0
    %1010 = vmatprep.subr.mxu0 0.0
    %1011 = vmatpush1.msra.mxu0 0.0
    %1012 = vmatprep.subr.mxu0 0.0
    %1013 = vmatpush1.msra.mxu0 0.0
    %1014 = vmatprep.subr.mxu0 0.0
    %1015 = vmatpush1.msra.mxu0 0.0
    %1016 = vmatprep.subr.mxu0 0.0
    %1017 = vmatpush1.msra.mxu0 0.0
    %1018 = vmatprep.subr.mxu0 0.0
    %1019 = vmatpush1.msra.mxu0 0.0
    %1020 = vmatprep.mubr.f32.mxu0 0.0
    %1021 = vmatmul.mubr.f32.gmra.mrb[0].mxu0 %v934
    %v1022 = vpop.f32.mrb[0].mxu0
    %v1023 = vadd.f32 %v955, %v1022
    %v1024 = vpop.f32.mrb[0].mxu0
    %1025 = vdwg.mxu0
    %vm1026 = vcmask 1041408
    %v1027 = vsel %vm1026, %v1023, -inf
    %1028 = vmax.xlane.f32.xlu0 %v1027
    %v1029 = vpop.xlane.xlu0 %1028
    %v1030 = vsub.f32 %v1023, %v1029
    %v1031 = vmul.f32 %v1030, 1.442695
    %v1032 = vpow.pop %v1031
    %v1033 = vsel %vm1026, %v1032, 0.0
    %1034 = vadd.xlane.f32.xlu0 %v1033
    %v1035 = vpop.xlane.xlu0 %1034
    %v1036 = vrcp.pop %v1035
    %v1037 = vmul.f32 %v1032, %v1036
    %v1038 = vld [vmem:[#allocation4 + $0x2a0] sm:$0xff]
    %v1039 = vld [vmem:[#allocation4 + $0x2a8] sm:$0xff]
    %v1040 = vld [vmem:[#allocation4 + $0x2b0] sm:$0xff]
    %v1041 = vld [vmem:[#allocation4 + $0x2b8] sm:$0xff]
    %v1042 = vld [vmem:[#allocation4 + $0x2c0] sm:$0xff]
    %v1043 = vld [vmem:[#allocation4 + $0x2c8] sm:$0xff]
    %v1044 = vld [vmem:[#allocation4 + $0x2d0] sm:$0xff]
    %v1045 = vld [vmem:[#allocation4 + $0x2d8] sm:$0xff]
    %v1046 = vld [vmem:[#allocation4 + $0x2e0] sm:$0xff]
    %v1047 = vld [vmem:[#allocation4 + $0x2e8] sm:$0xff]
    %v1048 = vld [vmem:[#allocation4 + $0x2f0] sm:$0xff]
    %v1049 = vld [vmem:[#allocation4 + $0x2f8] sm:$0xff]
    %v1050 = vld [vmem:[#allocation4 + $0x300] sm:$0xff]
    %v1051 = vld [vmem:[#allocation4 + $0x308] sm:$0xff]
    %v1052 = vld [vmem:[#allocation4 + $0x310] sm:$0xff]
    %v1053 = vld [vmem:[#allocation4 + $0x318] sm:$0xff]
    %v1054 = vld [vmem:[#allocation4 + $0x320] sm:$0xff]
    %v1055 = vld [vmem:[#allocation4 + $0x328] sm:$0xff]
    %v1056 = vld [vmem:[#allocation4 + $0x330] sm:$0xff]
    %v1057 = vld [vmem:[#allocation4 + $0x338] sm:$0xff]
    %v1058 = vld [vmem:[#allocation4 + $0x340] sm:$0xff]
    %v1059 = vld [vmem:[#allocation4 + $0x348] sm:$0xff]
    %v1060 = vld [vmem:[#allocation4 + $0x350] sm:$0xff]
    %v1061 = vld [vmem:[#allocation4 + $0x358] sm:$0xff]
    %v1062 = vld [vmem:[#allocation4 + $0x360] sm:$0xff]
    %v1063 = vld [vmem:[#allocation4 + $0x368] sm:$0xff]
    %v1064 = vld [vmem:[#allocation4 + $0x370] sm:$0xff]
    %v1065 = vld [vmem:[#allocation4 + $0x378] sm:$0xff]
    %v1066 = vld [vmem:[#allocation4 + $0x380] sm:$0xff]
    %v1067 = vld [vmem:[#allocation4 + $0x388] sm:$0xff]
    %v1068 = vld [vmem:[#allocation4 + $0x390] sm:$0xff]
    %v1069 = vld [vmem:[#allocation4 + $0x398] sm:$0xff]
    %1070 = vmatprep.subr.mxu0 0.0
    %1071 = vmatpush1.msra.mxu0 %v1054
    %1072 = vmatprep.subr.mxu0 0.0
    %1073 = vmatpush1.msra.mxu0 %v1055
    %1074 = vmatprep.subr.mxu0 0.0
    %1075 = vmatpush1.msra.mxu0 %v1056
    %1076 = vmatprep.subr.mxu0 0.0
    %1077 = vmatpush1.msra.mxu0 %v1057
    %1078 = vmatprep.subr.mxu0 0.0
    %1079 = vmatpush1.msra.mxu0 %v1058
    %1080 = vmatprep.subr.mxu0 0.0
    %1081 = vmatpush1.msra.mxu0 %v1059
    %1082 = vmatprep.subr.mxu0 0.0
    %1083 = vmatpush1.msra.mxu0 %v1060
    %1084 = vmatprep.subr.mxu0 0.0
    %1085 = vmatpush1.msra.mxu0 %v1061
    %1086 = vmatprep.subr.mxu0 0.0
    %1087 = vmatpush1.msra.mxu0 %v1062
    %1088 = vmatprep.subr.mxu0 0.0
    %1089 = vmatpush1.msra.mxu0 %v1063
    %1090 = vmatprep.subr.mxu0 0.0
    %1091 = vmatpush1.msra.mxu0 %v1064
    %1092 = vmatprep.subr.mxu0 0.0
    %1093 = vmatpush1.msra.mxu0 %v1065
    %1094 = vmatprep.subr.mxu0 0.0
    %1095 = vmatpush1.msra.mxu0 %v1066
    %1096 = vmatprep.subr.mxu0 0.0
    %1097 = vmatpush1.msra.mxu0 %v1067
    %1098 = vmatprep.subr.mxu0 0.0
    %1099 = vmatpush1.msra.mxu0 %v1068
    %1100 = vmatprep.subr.mxu0 0.0
    %1101 = vmatpush1.msra.mxu0 %v1069
    %1102 = vmatprep.subr.mxu0 0.0
    %1103 = vmatpush1.msra.mxu0 0.0
    %1104 = vmatprep.subr.mxu0 0.0
    %1105 = vmatpush1.msra.mxu0 0.0
    %1106 = vmatprep.subr.mxu0 0.0
    %1107 = vmatpush1.msra.mxu0 0.0
    %1108 = vmatprep.subr.mxu0 0.0
    %1109 = vmatpush1.msra.mxu0 0.0
    %1110 = vmatprep.subr.mxu0 0.0
    %1111 = vmatpush1.msra.mxu0 0.0
    %1112 = vmatprep.subr.mxu0 0.0
    %1113 = vmatpush1.msra.mxu0 0.0
    %1114 = vmatprep.subr.mxu0 0.0
    %1115 = vmatpush1.msra.mxu0 0.0
    %1116 = vmatprep.subr.mxu0 0.0
    %1117 = vmatpush1.msra.mxu0 0.0
    %1118 = vmatprep.subr.mxu0 0.0
    %1119 = vmatpush1.msra.mxu0 0.0
    %1120 = vmatprep.subr.mxu0 0.0
    %1121 = vmatpush1.msra.mxu0 0.0
    %1122 = vmatprep.subr.mxu0 0.0
    %1123 = vmatpush1.msra.mxu0 0.0
    %1124 = vmatprep.subr.mxu0 0.0
    %1125 = vmatpush1.msra.mxu0 0.0
    %1126 = vmatprep.subr.mxu0 0.0
    %1127 = vmatpush1.msra.mxu0 0.0
    %1128 = vmatprep.subr.mxu0 0.0
    %1129 = vmatpush1.msra.mxu0 0.0
    %1130 = vmatprep.subr.mxu0 0.0
    %1131 = vmatpush1.msra.mxu0 0.0
    %1132 = vmatprep.subr.mxu0 0.0
    %1133 = vmatpush1.msra.mxu0 0.0
    %1134 = vmatprep.mubr.f32.mxu0 0.0
    %1135 = vmatmul.mubr.f32.gmra.mrb[0].mxu0 %v1037
    %v1136 = vpop.f32.mrb[0].mxu0
    %v1137 = vadd.f32 0.0, %v1136
    %v1138 = vpop.f32.mrb[0].mxu0
    %1139 = vdwg.mxu0
    %1140 = vmatprep.subr.mxu0 0.0
    %1141 = vmatpush1.msra.mxu0 %v1038
    %1142 = vmatprep.subr.mxu0 0.0
    %1143 = vmatpush1.msra.mxu0 %v1039
    %1144 = vmatprep.subr.mxu0 0.0
    %1145 = vmatpush1.msra.mxu0 %v1040
    %1146 = vmatprep.subr.mxu0 0.0
    %1147 = vmatpush1.msra.mxu0 %v1041
    %1148 = vmatprep.subr.mxu0 0.0
    %1149 = vmatpush1.msra.mxu0 %v1042
    %1150 = vmatprep.subr.mxu0 0.0
    %1151 = vmatpush1.msra.mxu0 %v1043
    %1152 = vmatprep.subr.mxu0 0.0
    %1153 = vmatpush1.msra.mxu0 %v1044
    %1154 = vmatprep.subr.mxu0 0.0
    %1155 = vmatpush1.msra.mxu0 %v1045
    %1156 = vmatprep.subr.mxu0 0.0
    %1157 = vmatpush1.msra.mxu0 %v1046
    %1158 = vmatprep.subr.mxu0 0.0
    %1159 = vmatpush1.msra.mxu0 %v1047
    %1160 = vmatprep.subr.mxu0 0.0
    %1161 = vmatpush1.msra.mxu0 %v1048
    %1162 = vmatprep.subr.mxu0 0.0
    %1163 = vmatpush1.msra.mxu0 %v1049
    %1164 = vmatprep.subr.mxu0 0.0
    %1165 = vmatpush1.msra.mxu0 %v1050
    %1166 = vmatprep.subr.mxu0 0.0
    %1167 = vmatpush1.msra.mxu0 %v1051
    %1168 = vmatprep.subr.mxu0 0.0
    %1169 = vmatpush1.msra.mxu0 %v1052
    %1170 = vmatprep.subr.mxu0 0.0
    %1171 = vmatpush1.msra.mxu0 %v1053
    %1172 = vmatprep.subr.mxu0 0.0
    %1173 = vmatpush1.msra.mxu0 0.0
    %1174 = vmatprep.subr.mxu0 0.0
    %1175 = vmatpush1.msra.mxu0 0.0
    %1176 = vmatprep.subr.mxu0 0.0
    %1177 = vmatpush1.msra.mxu0 0.0
    %1178 = vmatprep.subr.mxu0 0.0
    %1179 = vmatpush1.msra.mxu0 0.0
    %1180 = vmatprep.subr.mxu0 0.0
    %1181 = vmatpush1.msra.mxu0 0.0
    %1182 = vmatprep.subr.mxu0 0.0
    %1183 = vmatpush1.msra.mxu0 0.0
    %1184 = vmatprep.subr.mxu0 0.0
    %1185 = vmatpush1.msra.mxu0 0.0
    %1186 = vmatprep.subr.mxu0 0.0
    %1187 = vmatpush1.msra.mxu0 0.0
    %1188 = vmatprep.subr.mxu0 0.0
    %1189 = vmatpush1.msra.mxu0 0.0
    %1190 = vmatprep.subr.mxu0 0.0
    %1191 = vmatpush1.msra.mxu0 0.0
    %1192 = vmatprep.subr.mxu0 0.0
    %1193 = vmatpush1.msra.mxu0 0.0
    %1194 = vmatprep.subr.mxu0 0.0
    %1195 = vmatpush1.msra.mxu0 0.0
    %1196 = vmatprep.subr.mxu0 0.0
    %1197 = vmatpush1.msra.mxu0 0.0
    %1198 = vmatprep.subr.mxu0 0.0
    %1199 = vmatpush1.msra.mxu0 0.0
    %1200 = vmatprep.subr.mxu0 0.0
    %1201 = vmatpush1.msra.mxu0 0.0
    %1202 = vmatprep.subr.mxu0 0.0
    %1203 = vmatpush1.msra.mxu0 0.0
    %1204 = vmatprep.mubr.f32.mxu0 0.0
    %1205 = vmatmul.mubr.f32.gmra.mrb[0].mxu0 %v842
    %v1206 = vpop.f32.mrb[0].mxu0
    %v1207 = vadd.f32 %v1137, %v1206
    %v1208 = vpop.f32.mrb[0].mxu0
    %1209 = vdwg.mxu0
    %v1210 = vld [vmem:[#allocation4 + $0x3a0] sm:$0x1]
    %v1211 = vlaneseq
    %v1212 = vshrl.u32 %v1211, 7
    %v1213 = vsub.s32 0, %v1212
    %v1214 = vrot.slane %v1210, %v1213
    %v1215 = vadd.f32 %v1207, %v1214
    %1216 = vst [vmem:[%s3] sm:$0x3] %v1215
    // Predicated region
    $region22: #{joint_cnn_policy_critic_forward.1} parent=1 // pred_check
      _
    $region23: #{joint_cnn_policy_critic_forward.1} parent=1 // pred_check_branch
      %1218 = sbr.rel (0) target = $region25
    $region24: #{joint_cnn_policy_critic_forward.1} parent=1 // pred_region
      _
    $region25: #{joint_cnn_policy_critic_forward.1} parent=1 // pred_fallthru
      _
    // Predicated region
    $region26: #{joint_cnn_policy_critic_forward.1} parent=1 // pred_check
      _
    $region27: #{joint_cnn_policy_critic_forward.1} parent=1 // pred_check_branch
      %1220 = sbr.rel (0) target = $region29
    $region28: #{joint_cnn_policy_critic_forward.1} parent=1 // pred_region
      _
    $region29: #{joint_cnn_policy_critic_forward.1} parent=1 // pred_fallthru
      _
    %1221 = vsyncpa [#allocation3], 1
    %1222 = vsyncpa [#allocation5], 1

</llo_original>
